<compile_context>
chip_gen: v7x
topology: tpu7x:2x2x1
jax: 0.10.0
libtpu: 0.0.40
codegen_flags: <defaults>
</compile_context>

<pallas_src>
import functools
import math

import jax
import jax.numpy as jnp
from jax.experimental import pallas as pl
from jax.experimental.pallas import tpu as pltpu

LN_EPS = 1e-5
APPROX_RECIP = True   # exact-reciprocal fallback flag for the softmax denominator


def _round_up(x, m):
    return (x + m - 1) // m * m


def _layernorm(x, g, b, eps=LN_EPS):
    mu = jnp.mean(x, axis=-1, keepdims=True)
    var = jnp.mean((x - mu) ** 2, axis=-1, keepdims=True)
    return (x - mu) * jax.lax.rsqrt(var + eps) * g + b


def _gelu_new(x):
    # GPT-2 "gelu_new" activation
    return 0.5 * x * (1.0 + jnp.tanh(
        math.sqrt(2.0 / math.pi) * (x + 0.044715 * x ** 3)))


# ----------------------------- fused Pallas kernel ---------------------------

def fused_transformer_kernel(
        zs_ref, w_in_ref, b_in_ref, wpe_ref,
        ln1g_ref, ln1b_ref, wqkv_ref, bqkv_ref, wproj_ref, bproj_ref,
        ln2g_ref, ln2b_ref, wfc_ref, bfc_ref, wfc2_ref, bfc2_ref,
        lnfg_ref, lnfb_ref, wout_ref,
        out_ref, x_ref, *, n_head, n_layer):
    layer = pl.program_id(1)

    # ---- read_in + positional embedding (first layer step only) ----
    @pl.when(layer == 0)
    def _embed():
        z = zs_ref[0]                                       # (T, D) f32
        x_ref[...] = (jnp.dot(z, w_in_ref[...],
                              preferred_element_type=jnp.float32)
                      + b_in_ref[...] + wpe_ref[...])

    x = x_ref[...]                                          # (T, E) f32 residual
    T, E = x.shape
    hd = E // n_head
    scale = 1.0 / math.sqrt(hd)

    # ---- causal multi-head self-attention (pre-LN) ----
    h = _layernorm(x, ln1g_ref[0], ln1b_ref[0]).astype(jnp.bfloat16)
    # ONE fused QKV projection: (T,E) @ (E,3E) at full MXU width.
    qkv = (jnp.dot(h, wqkv_ref[0], preferred_element_type=jnp.float32)
           + bqkv_ref[0])                                   # (T, 3E) f32

    # Single 2-D causal mask, reused by every head.
    rows = jax.lax.broadcasted_iota(jnp.int32, (T, T), 0)
    cols = jax.lax.broadcasted_iota(jnp.int32, (T, T), 1)
    causal = cols <= rows

    o_heads = []
    for hh in range(n_head):                                # static unrolled loop
        qh = qkv[:, hh * hd:(hh + 1) * hd].astype(jnp.bfloat16)
        kh = qkv[:, E + hh * hd:E + (hh + 1) * hd].astype(jnp.bfloat16)
        vh = qkv[:, 2 * E + hh * hd:2 * E + (hh + 1) * hd].astype(jnp.bfloat16)
        s = jax.lax.dot_general(qh, kh, (((1,), (1,)), ((), ())),
                                preferred_element_type=jnp.float32) * scale
        s = jnp.where(causal, s, -1e30)
        s = s - jnp.max(s, axis=-1, keepdims=True)
        p = jnp.exp(s)
        denom = jnp.sum(p, axis=-1, keepdims=True)
        if APPROX_RECIP:
            p = p * pl.reciprocal(denom, approx=True)
        else:
            p = p / denom
        o_heads.append(jnp.dot(p.astype(jnp.bfloat16), vh,
                               preferred_element_type=jnp.float32))   # (T, hd)

    # Fused output projection: concat heads -> (T,E), one (T,E)@(E,E) matmul.
    o = jnp.concatenate(o_heads, axis=-1).astype(jnp.bfloat16)        # (T, E)
    attn = (jnp.dot(o, wproj_ref[0], preferred_element_type=jnp.float32)
            + bproj_ref[0])
    x = x + attn

    # ---- MLP (pre-LN) ----
    h2 = _layernorm(x, ln2g_ref[0], ln2b_ref[0]).astype(jnp.bfloat16)
    a = jnp.dot(h2, wfc_ref[0], preferred_element_type=jnp.float32) + bfc_ref[0]
    a = _gelu_new(a).astype(jnp.bfloat16)
    m = jnp.dot(a, wfc2_ref[0], preferred_element_type=jnp.float32) + bfc2_ref[0]
    x = x + m

    # carry to next layer step (skip the store on the final layer)
    @pl.when(layer < n_layer - 1)
    def _carry():
        x_ref[...] = x

    # ---- ln_f + read_out (after last layer), lane-dense (1, T) store ----
    @pl.when(layer == n_layer - 1)
    def _head():
        hf = _layernorm(x, lnfg_ref[...], lnfb_ref[...])
        pred = jnp.sum(hf * wout_ref[...], axis=-1, keepdims=True)    # (T, 1)
        out_ref[0] = pred.T                                           # (1, T)


# --------------------------------- wrapper -----------------------------------

_LAYER_PARAM_NAMES = ("ln1_g", "ln1_b", "w_qkv", "b_qkv", "w_proj", "b_proj",
                      "ln2_g", "ln2_b", "w_fc", "b_fc", "w_fc2", "b_fc2")
_BF16_LAYER_PARAMS = frozenset({"w_qkv", "w_proj", "w_fc", "w_fc2"})


def _combine(xs, ys):
    # Interleave xs and (padded) ys along time: x0, y0, x1, y1, ...
    B, P, D = xs.shape
    ys_pad = jnp.concatenate(
        [ys[..., None], jnp.zeros((B, P, D - 1), xs.dtype)], axis=2)
    return jnp.stack([xs, ys_pad], axis=2).reshape(B, 2 * P, D)


def _prep_layer_params(blocks):
    """Stack per-layer params on a leading layer axis; big matmul weights -> bf16."""
    out = {}
    for name in _LAYER_PARAM_NAMES:
        arr = jnp.stack([blk[name] for blk in blocks], axis=0)
        if name in _BF16_LAYER_PARAMS:
            arr = arr.astype(jnp.bfloat16)
        out[name] = arr
    return out


def _vmem_limit_bytes(T, E, D):
    """Rough per-grid-step VMEM budget; keeps headroom under v7x's 64 MiB."""
    f32, bf16 = 4, 2
    resident = (T * E + D * E + 6 * E) * f32                 # wpe, w_in, ln_f, w_out
    weights = 2 * (12 * E * E * bf16 + 12 * E * f32)         # double-buffered layer params
    act = T * E * f32                                        # carried activation scratch
    transient = (3 * T * E + 2 * T * T + 8 * T * E) * f32    # qkv, scores, mlp temps
    io = 2 * (T * D + T) * f32                               # zs / out double buffers
    est = resident + weights + act + transient + io
    return int(min(56 * 1024 * 1024, max(16 * 1024 * 1024, 2 * est)))


def transformer_forward(xs, ys, params, *, n_head):
    B, P, D = xs.shape
    T = 2 * P
    E = params["w_in"].shape[1]
    n_layer = len(params["blocks"])
    assert E % n_head == 0, (E, n_head)
    assert T <= params["wpe"].shape[0], "sequence longer than positional table"

    # Pad T for lane/sublane friendliness (128-multiple for long sequences).
    T_pad = _round_up(T, 128) if T >= 128 else _round_up(T, 8)

    zs = _combine(xs, ys)                                    # (B, T, D)
    wpe = params["wpe"][:T]
    if T_pad > T:
        zs = jnp.pad(zs, ((0, 0), (0, T_pad - T), (0, 0)))
        wpe = jnp.pad(wpe, ((0, T_pad - T), (0, 0)))

    layered = _prep_layer_params(params["blocks"])

    def const_spec(shape):
        nd = len(shape)
        return pl.BlockSpec(tuple(shape), lambda b, l, _nd=nd: (0,) * _nd)

    def layer_spec(shape):
        nd = len(shape)
        return pl.BlockSpec((1,) + tuple(shape[1:]),
                            lambda b, l, _nd=nd: (l,) + (0,) * (_nd - 1))

    in_specs = [
        pl.BlockSpec((1, T_pad, D), lambda b, l: (b, 0, 0)),  # zs
        const_spec((D, E)),                                   # w_in
        const_spec((1, E)),                                   # b_in
        const_spec((T_pad, E)),                               # wpe
    ]
    layer_args = []
    for name in _LAYER_PARAM_NAMES:
        arr = layered[name]
        layer_args.append(arr)
        in_specs.append(layer_spec(arr.shape))
    in_specs += [const_spec((1, E)), const_spec((1, E)),      # ln_f_g, ln_f_b
                 const_spec((1, E))]                          # w_out

    out = pl.pallas_call(
        functools.partial(fused_transformer_kernel,
                          n_head=n_head, n_layer=n_layer),
        out_shape=jax.ShapeDtypeStruct((B, 1, T_pad), jnp.float32),
        grid=(B, n_layer),
        in_specs=in_specs,
        out_specs=pl.BlockSpec((1, 1, T_pad), lambda b, l: (b, 0, 0)),
        scratch_shapes=[pltpu.VMEM((T_pad, E), jnp.float32)],
        compiler_params=pltpu.CompilerParams(
            # B axis is "parallel": with B >= 2 it feeds both v7x TensorCores.
            dimension_semantics=("parallel", "arbitrary"),
            vmem_limit_bytes=_vmem_limit_bytes(T_pad, E, D)),
    )(zs, params["w_in"], params["b_in"], wpe,
      *layer_args,
      params["ln_f_g"], params["ln_f_b"], params["w_out"])

    # prediction[:, ::2, 0][:, inds] with inds = arange(P); b_out folded here.
    return out[:, 0, 0:T:2] + params["b_out"][0, 0]


# -------------------------- parameter construction ---------------------------

def init_params(key, n_dims, n_positions, n_embd, n_layer):
    E = n_embd
    counter = [0]

    def nrm(shape, std=0.02):
        counter[0] += 1
        k = jax.random.fold_in(key, counter[0])
        return std * jax.random.normal(k, shape, jnp.float32)

    params = {
        "w_in": nrm((n_dims, E)),
        "b_in": nrm((1, E)),
        "wpe": nrm((2 * n_positions, E), 0.01),
        "ln_f_g": 1.0 + nrm((1, E), 0.05),
        "ln_f_b": nrm((1, E), 0.05),
        "w_out": nrm((1, E)),      # read_out weight, shape (out=1, in=E)
        "b_out": jnp.zeros((1, 1), jnp.float32),
        "blocks": [],
    }
    for _ in range(n_layer):
        params["blocks"].append({
            "ln1_g": 1.0 + nrm((1, E), 0.05),
            "ln1_b": nrm((1, E), 0.05),
            "w_qkv": nrm((E, 3 * E)),
            "b_qkv": nrm((1, 3 * E)),
            "w_proj": nrm((E, E)),
            "b_proj": nrm((1, E)),
            "ln2_g": 1.0 + nrm((1, E), 0.05),
            "ln2_b": nrm((1, E), 0.05),
            "w_fc": nrm((E, 4 * E)),
            "b_fc": nrm((1, 4 * E)),
            "w_fc2": nrm((4 * E, E)),
            "b_fc2": nrm((1, E)),
        })
    return params


# ----------------------------- pure-JAX reference ----------------------------

def reference_forward(xs, ys, params, n_head):
    hp = jax.lax.Precision.HIGHEST
    B, P, D = xs.shape
    T = 2 * P
    zs = _combine(xs, ys)
    x = (jnp.einsum("btd,de->bte", zs, params["w_in"], precision=hp)
         + params["b_in"] + params["wpe"][:T])
    E = x.shape[-1]
    hd = E // n_head
    causal = jnp.tril(jnp.ones((T, T), bool))
    for L in params["blocks"]:
        h = _layernorm(x, L["ln1_g"], L["ln1_b"])
        qkv = jnp.einsum("bte,ef->btf", h, L["w_qkv"], precision=hp) + L["b_qkv"]
        q, k, v = jnp.split(qkv, 3, axis=-1)
        q = q.reshape(B, T, n_head, hd).transpose(0, 2, 1, 3)
        k = k.reshape(B, T, n_head, hd).transpose(0, 2, 1, 3)
        v = v.reshape(B, T, n_head, hd).transpose(0, 2, 1, 3)
        s = jnp.einsum("bhqd,bhkd->bhqk", q, k, precision=hp) / math.sqrt(hd)
        s = jnp.where(causal, s, -1e30)
        p = jax.nn.softmax(s, axis=-1)
        a = jnp.einsum("bhqk,bhkd->bhqd", p, v, precision=hp)
        a = a.transpose(0, 2, 1, 3).reshape(B, T, E)
        a = jnp.einsum("bte,ef->btf", a, L["w_proj"], precision=hp) + L["b_proj"]
        x = x + a
        h2 = _layernorm(x, L["ln2_g"], L["ln2_b"])
        m = jnp.einsum("bte,ef->btf", h2, L["w_fc"], precision=hp) + L["b_fc"]
        m = _gelu_new(m)
        m = jnp.einsum("btf,fe->bte", m, L["w_fc2"], precision=hp) + L["b_fc2"]
        x = x + m
    h = _layernorm(x, params["ln_f_g"], params["ln_f_b"])
    pred = (jnp.einsum("bte,oe->bto", h, params["w_out"], precision=hp)
            + params["b_out"])
    return pred[:, ::2, 0]


# ---------------------------------- main --------------------------------------

if __name__ == "__main__":
    B, P, D = 2, 8, 8          # batch, points, n_dims
    E, n_layer, n_head = 32, 2, 4

    key = jax.random.PRNGKey(0)
    kx, ky, kp = jax.random.split(key, 3)
    xs = jax.random.normal(kx, (B, P, D), jnp.float32)
    ys = jax.random.normal(ky, (B, P), jnp.float32)
    params = init_params(kp, D, P, E, n_layer)

    out = transformer_forward(xs, ys, params, n_head=n_head)
    out = jax.block_until_ready(out)
    assert out.shape == (B, P), out.shape

    ref = reference_forward(xs, ys, params, n_head)
    max_err = float(jnp.max(jnp.abs(out - ref)))
    # bf16 MXU operands (per perf review) widen the tolerance vs the f32-only
    # path; the kernel otherwise matches the HIGHEST-precision f32 reference.
    if not (max_err < 2.5e-2):
        raise AssertionError(f"mismatch vs reference, max_err={max_err}")

    print("KERNEL_OK")
</pallas_src>

<mosaic_0001>
module attributes {stable_mosaic.version = 11 : i64} {
  func.func @fused_transformer_kernel(%arg0: i32, %arg1: i32, %arg2: memref<1x16x8xf32, #tpu.memory_space<vmem>>, %arg3: memref<8x32xf32, #tpu.memory_space<vmem>>, %arg4: memref<1x32xf32, #tpu.memory_space<vmem>>, %arg5: memref<16x32xf32, #tpu.memory_space<vmem>>, %arg6: memref<1x1x32xf32, #tpu.memory_space<vmem>>, %arg7: memref<1x1x32xf32, #tpu.memory_space<vmem>>, %arg8: memref<1x32x96xbf16, #tpu.memory_space<vmem>>, %arg9: memref<1x1x96xf32, #tpu.memory_space<vmem>>, %arg10: memref<1x32x32xbf16, #tpu.memory_space<vmem>>, %arg11: memref<1x1x32xf32, #tpu.memory_space<vmem>>, %arg12: memref<1x1x32xf32, #tpu.memory_space<vmem>>, %arg13: memref<1x1x32xf32, #tpu.memory_space<vmem>>, %arg14: memref<1x32x128xbf16, #tpu.memory_space<vmem>>, %arg15: memref<1x1x128xf32, #tpu.memory_space<vmem>>, %arg16: memref<1x128x32xbf16, #tpu.memory_space<vmem>>, %arg17: memref<1x1x32xf32, #tpu.memory_space<vmem>>, %arg18: memref<1x32xf32, #tpu.memory_space<vmem>>, %arg19: memref<1x32xf32, #tpu.memory_space<vmem>>, %arg20: memref<1x32xf32, #tpu.memory_space<vmem>>, %arg21: memref<1x1x16xf32, #tpu.memory_space<vmem>>, %arg22: memref<16x32xf32, #tpu.memory_space<vmem>>) attributes {dimension_semantics = [#tpu.dimension_semantics<parallel>, #tpu.dimension_semantics<arbitrary>], iteration_bounds = array<i64: 2, 2>, scalar_prefetch = 0 : i64, scratch_operands = 1 : i64, tpu.core_type = #tpu.core_type<tc>, window_params = [{transform_indices = @transform_0, window_bounds = array<i64: 1, 16, 8>}, {pipeline_mode = #tpu.pipeline_mode<synchronous>, transform_indices = @transform_1, window_bounds = array<i64: 8, 32>}, {pipeline_mode = #tpu.pipeline_mode<synchronous>, transform_indices = @transform_2, window_bounds = array<i64: 1, 32>}, {pipeline_mode = #tpu.pipeline_mode<synchronous>, transform_indices = @transform_3, window_bounds = array<i64: 16, 32>}, {transform_indices = @transform_4, window_bounds = array<i64: 1, 1, 32>}, {transform_indices = @transform_5, window_bounds = array<i64: 1, 1, 32>}, {transform_indices = @transform_6, window_bounds = array<i64: 1, 32, 96>}, {transform_indices = @transform_7, window_bounds = array<i64: 1, 1, 96>}, {transform_indices = @transform_8, window_bounds = array<i64: 1, 32, 32>}, {transform_indices = @transform_9, window_bounds = array<i64: 1, 1, 32>}, {transform_indices = @transform_10, window_bounds = array<i64: 1, 1, 32>}, {transform_indices = @transform_11, window_bounds = array<i64: 1, 1, 32>}, {transform_indices = @transform_12, window_bounds = array<i64: 1, 32, 128>}, {transform_indices = @transform_13, window_bounds = array<i64: 1, 1, 128>}, {transform_indices = @transform_14, window_bounds = array<i64: 1, 128, 32>}, {transform_indices = @transform_15, window_bounds = array<i64: 1, 1, 32>}, {pipeline_mode = #tpu.pipeline_mode<synchronous>, transform_indices = @transform_16, window_bounds = array<i64: 1, 32>}, {pipeline_mode = #tpu.pipeline_mode<synchronous>, transform_indices = @transform_17, window_bounds = array<i64: 1, 32>}, {pipeline_mode = #tpu.pipeline_mode<synchronous>, transform_indices = @transform_18, window_bounds = array<i64: 1, 32>}, {transform_indices = @transform_19, window_bounds = array<i64: 1, 1, 16>}]} {
    %c0_i32 = arith.constant 0 : i32
    %0 = arith.cmpi eq, %arg1, %c0_i32 : i32
    %1 = arith.extui %0 : i1 to i32
    %c0_i32_0 = arith.constant 0 : i32
    %2 = arith.cmpi ne, %1, %c0_i32_0 : i32
    scf.if %2 {
      %c0_82 = arith.constant 0 : index
      %c0_83 = arith.constant 0 : index
      %c0_84 = arith.constant 0 : index
      %205 = vector.load %arg2[%c0_82, %c0_83, %c0_84] : memref<1x16x8xf32, #tpu.memory_space<vmem>>, vector<1x16x8xf32>
      %206 = vector.shape_cast %205 : vector<1x16x8xf32> to vector<16x8xf32>
      %c0_85 = arith.constant 0 : index
      %c0_86 = arith.constant 0 : index
      %207 = vector.load %arg3[%c0_85, %c0_86] : memref<8x32xf32, #tpu.memory_space<vmem>>, vector<8x32xf32>
      %cst_87 = arith.constant dense<0.000000e+00> : vector<16x32xf32>
      %208 = tpu.matmul %206, %207, %cst_87 {dimension_numbers = #tpu.dot_dimension_numbers<[1], [0], [0], [1], [0, 0, 1, 1], [], []>} : vector<16x8xf32>, vector<8x32xf32>, vector<16x32xf32> -> vector<16x32xf32>
      %c0_88 = arith.constant 0 : index
      %c0_89 = arith.constant 0 : index
      %209 = vector.load %arg4[%c0_88, %c0_89] : memref<1x32xf32, #tpu.memory_space<vmem>>, vector<1x32xf32>
      %210 = vector.broadcast %209 : vector<1x32xf32> to vector<16x32xf32>
      %211 = arith.addf %208, %210 : vector<16x32xf32>
      %c0_90 = arith.constant 0 : index
      %c0_91 = arith.constant 0 : index
      %212 = vector.load %arg5[%c0_90, %c0_91] : memref<16x32xf32, #tpu.memory_space<vmem>>, vector<16x32xf32>
      %213 = arith.addf %211, %212 : vector<16x32xf32>
      %c0_92 = arith.constant 0 : index
      %c0_93 = arith.constant 0 : index
      %214 = vector.load %arg22[%c0_92, %c0_93] : memref<16x32xf32, #tpu.memory_space<vmem>>, vector<16x32xf32>
      tpu.vector_store %arg22[%c0_92, %c0_93], %213 {strides = array<i32>} : memref<16x32xf32, #tpu.memory_space<vmem>>, vector<16x32xf32>,
    } else {
    }
    %c0 = arith.constant 0 : index
    %c0_1 = arith.constant 0 : index
    %3 = vector.load %arg22[%c0, %c0_1] : memref<16x32xf32, #tpu.memory_space<vmem>>, vector<16x32xf32>
    %c0_2 = arith.constant 0 : index
    %c0_3 = arith.constant 0 : index
    %c0_4 = arith.constant 0 : index
    %4 = vector.load %arg6[%c0_2, %c0_3, %c0_4] : memref<1x1x32xf32, #tpu.memory_space<vmem>>, vector<1x1x32xf32>
    %5 = vector.shape_cast %4 : vector<1x1x32xf32> to vector<1x32xf32>
    %c0_5 = arith.constant 0 : index
    %c0_6 = arith.constant 0 : index
    %c0_7 = arith.constant 0 : index
    %6 = vector.load %arg7[%c0_5, %c0_6, %c0_7] : memref<1x1x32xf32, #tpu.memory_space<vmem>>, vector<1x1x32xf32>
    %7 = vector.shape_cast %6 : vector<1x1x32xf32> to vector<1x32xf32>
    %cst = arith.constant dense<0.000000e+00> : vector<16xf32>
    %8 = vector.multi_reduction <add>, %3, %cst [1] : vector<16x32xf32> to vector<16xf32>
    %9 = vector.shape_cast %8 : vector<16xf32> to vector<16x1xf32>
    %cst_8 = arith.constant 3.200000e+01 : f32
    %10 = vector.broadcast %cst_8 : f32 to vector<16x1xf32>
    %11 = arith.divf %9, %10 : vector<16x1xf32>
    %12 = vector.broadcast %11 : vector<16x1xf32> to vector<16x32xf32>
    %13 = arith.subf %3, %12 : vector<16x32xf32>
    %14 = arith.mulf %13, %13 : vector<16x32xf32>
    %cst_9 = arith.constant dense<0.000000e+00> : vector<16xf32>
    %15 = vector.multi_reduction <add>, %14, %cst_9 [1] : vector<16x32xf32> to vector<16xf32>
    %16 = vector.shape_cast %15 : vector<16xf32> to vector<16x1xf32>
    %cst_10 = arith.constant 3.200000e+01 : f32
    %17 = vector.broadcast %cst_10 : f32 to vector<16x1xf32>
    %18 = arith.divf %16, %17 : vector<16x1xf32>
    %19 = vector.broadcast %11 : vector<16x1xf32> to vector<16x32xf32>
    %20 = arith.subf %3, %19 : vector<16x32xf32>
    %cst_11 = arith.constant 9.99999974E-6 : f32
    %21 = vector.broadcast %cst_11 : f32 to vector<16x1xf32>
    %22 = arith.addf %18, %21 : vector<16x1xf32>
    %23 = math.rsqrt %22 : vector<16x1xf32>
    %24 = vector.broadcast %23 : vector<16x1xf32> to vector<16x32xf32>
    %25 = arith.mulf %20, %24 : vector<16x32xf32>
    %26 = vector.broadcast %5 : vector<1x32xf32> to vector<16x32xf32>
    %27 = arith.mulf %25, %26 : vector<16x32xf32>
    %28 = vector.broadcast %7 : vector<1x32xf32> to vector<16x32xf32>
    %29 = arith.addf %27, %28 : vector<16x32xf32>
    %30 = arith.truncf %29 : vector<16x32xf32> to vector<16x32xbf16>
    %c0_12 = arith.constant 0 : index
    %c0_13 = arith.constant 0 : index
    %c0_14 = arith.constant 0 : index
    %31 = vector.load %arg8[%c0_12, %c0_13, %c0_14] : memref<1x32x96xbf16, #tpu.memory_space<vmem>>, vector<1x32x96xbf16>
    %32 = vector.shape_cast %31 : vector<1x32x96xbf16> to vector<32x96xbf16>
    %cst_15 = arith.constant dense<0.000000e+00> : vector<16x96xf32>
    %33 = tpu.matmul %30, %32, %cst_15 {dimension_numbers = #tpu.dot_dimension_numbers<[1], [0], [0], [1], [0, 0, 1, 1], [], []>} : vector<16x32xbf16>, vector<32x96xbf16>, vector<16x96xf32> -> vector<16x96xf32>
    %c0_16 = arith.constant 0 : index
    %c0_17 = arith.constant 0 : index
    %c0_18 = arith.constant 0 : index
    %34 = vector.load %arg9[%c0_16, %c0_17, %c0_18] : memref<1x1x96xf32, #tpu.memory_space<vmem>>, vector<1x1x96xf32>
    %35 = vector.shape_cast %34 : vector<1x1x96xf32> to vector<1x96xf32>
    %36 = vector.broadcast %35 : vector<1x96xf32> to vector<16x96xf32>
    %37 = arith.addf %33, %36 : vector<16x96xf32>
    %38 = tpu.iota {dimensions = array<i32: 0>} : vector<16x16xi32>
    %39 = tpu.iota {dimensions = array<i32: 1>} : vector<16x16xi32>
    %40 = arith.cmpi sle, %39, %38 : vector<16x16xi32>
    %41 = vector.extract_strided_slice %37 {offsets = [0, 0], sizes = [16, 8], strides = [1, 1]} : vector<16x96xf32> to vector<16x8xf32>
    %42 = arith.truncf %41 : vector<16x8xf32> to vector<16x8xbf16>
    %43 = vector.extract_strided_slice %37 {offsets = [0, 32], sizes = [16, 8], strides = [1, 1]} : vector<16x96xf32> to vector<16x8xf32>
    %44 = arith.truncf %43 : vector<16x8xf32> to vector<16x8xbf16>
    %45 = vector.extract_strided_slice %37 {offsets = [0, 64], sizes = [16, 8], strides = [1, 1]} : vector<16x96xf32> to vector<16x8xf32>
    %46 = arith.truncf %45 : vector<16x8xf32> to vector<16x8xbf16>
    %cst_19 = arith.constant dense<0.000000e+00> : vector<16x16xf32>
    %47 = tpu.matmul %42, %44, %cst_19 {dimension_numbers = #tpu.dot_dimension_numbers<[1], [1], [0], [0], [0, 0, 1, 0], [], []>} : vector<16x8xbf16>, vector<16x8xbf16>, vector<16x16xf32> -> vector<16x16xf32>
    %cst_20 = arith.constant 0.353553385 : f32
    %48 = vector.broadcast %cst_20 : f32 to vector<16x16xf32>
    %49 = arith.mulf %47, %48 : vector<16x16xf32>
    %cst_21 = arith.constant -1.000000e+30 : f32
    %50 = vector.broadcast %cst_21 : f32 to vector<16x16xf32>
    %51 = arith.select %40, %49, %50 : vector<16x16xi1>, vector<16x16xf32>
    %cst_22 = arith.constant dense<0xFF800000> : vector<16xf32>
    %52 = vector.multi_reduction <maximumf>, %51, %cst_22 [1] : vector<16x16xf32> to vector<16xf32>
    %53 = vector.shape_cast %52 : vector<16xf32> to vector<16x1xf32>
    %54 = vector.broadcast %53 : vector<16x1xf32> to vector<16x16xf32>
    %55 = arith.subf %51, %54 : vector<16x16xf32>
    %56 = math.exp %55 : vector<16x16xf32>
    %cst_23 = arith.constant dense<0.000000e+00> : vector<16xf32>
    %57 = vector.multi_reduction <add>, %56, %cst_23 [1] : vector<16x16xf32> to vector<16xf32>
    %58 = vector.shape_cast %57 : vector<16xf32> to vector<16x1xf32>
    %59 = tpu.reciprocal %58 {approx = true} : vector<16x1xf32> -> vector<16x1xf32>
    %60 = vector.broadcast %59 : vector<16x1xf32> to vector<16x16xf32>
    %61 = arith.mulf %56, %60 : vector<16x16xf32>
    %62 = arith.truncf %61 : vector<16x16xf32> to vector<16x16xbf16>
    %cst_24 = arith.constant dense<0.000000e+00> : vector<16x8xf32>
    %63 = tpu.matmul %62, %46, %cst_24 {dimension_numbers = #tpu.dot_dimension_numbers<[1], [0], [0], [1], [0, 0, 1, 1], [], []>} : vector<16x16xbf16>, vector<16x8xbf16>, vector<16x8xf32> -> vector<16x8xf32>
    %64 = vector.extract_strided_slice %37 {offsets = [0, 8], sizes = [16, 8], strides = [1, 1]} : vector<16x96xf32> to vector<16x8xf32>
    %65 = arith.truncf %64 : vector<16x8xf32> to vector<16x8xbf16>
    %66 = vector.extract_strided_slice %37 {offsets = [0, 40], sizes = [16, 8], strides = [1, 1]} : vector<16x96xf32> to vector<16x8xf32>
    %67 = arith.truncf %66 : vector<16x8xf32> to vector<16x8xbf16>
    %68 = vector.extract_strided_slice %37 {offsets = [0, 72], sizes = [16, 8], strides = [1, 1]} : vector<16x96xf32> to vector<16x8xf32>
    %69 = arith.truncf %68 : vector<16x8xf32> to vector<16x8xbf16>
    %cst_25 = arith.constant dense<0.000000e+00> : vector<16x16xf32>
    %70 = tpu.matmul %65, %67, %cst_25 {dimension_numbers = #tpu.dot_dimension_numbers<[1], [1], [0], [0], [0, 0, 1, 0], [], []>} : vector<16x8xbf16>, vector<16x8xbf16>, vector<16x16xf32> -> vector<16x16xf32>
    %cst_26 = arith.constant 0.353553385 : f32
    %71 = vector.broadcast %cst_26 : f32 to vector<16x16xf32>
    %72 = arith.mulf %70, %71 : vector<16x16xf32>
    %cst_27 = arith.constant -1.000000e+30 : f32
    %73 = vector.broadcast %cst_27 : f32 to vector<16x16xf32>
    %74 = arith.select %40, %72, %73 : vector<16x16xi1>, vector<16x16xf32>
    %cst_28 = arith.constant dense<0xFF800000> : vector<16xf32>
    %75 = vector.multi_reduction <maximumf>, %74, %cst_28 [1] : vector<16x16xf32> to vector<16xf32>
    %76 = vector.shape_cast %75 : vector<16xf32> to vector<16x1xf32>
    %77 = vector.broadcast %76 : vector<16x1xf32> to vector<16x16xf32>
    %78 = arith.subf %74, %77 : vector<16x16xf32>
    %79 = math.exp %78 : vector<16x16xf32>
    %cst_29 = arith.constant dense<0.000000e+00> : vector<16xf32>
    %80 = vector.multi_reduction <add>, %79, %cst_29 [1] : vector<16x16xf32> to vector<16xf32>
    %81 = vector.shape_cast %80 : vector<16xf32> to vector<16x1xf32>
    %82 = tpu.reciprocal %81 {approx = true} : vector<16x1xf32> -> vector<16x1xf32>
    %83 = vector.broadcast %82 : vector<16x1xf32> to vector<16x16xf32>
    %84 = arith.mulf %79, %83 : vector<16x16xf32>
    %85 = arith.truncf %84 : vector<16x16xf32> to vector<16x16xbf16>
    %cst_30 = arith.constant dense<0.000000e+00> : vector<16x8xf32>
    %86 = tpu.matmul %85, %69, %cst_30 {dimension_numbers = #tpu.dot_dimension_numbers<[1], [0], [0], [1], [0, 0, 1, 1], [], []>} : vector<16x16xbf16>, vector<16x8xbf16>, vector<16x8xf32> -> vector<16x8xf32>
    %87 = vector.extract_strided_slice %37 {offsets = [0, 16], sizes = [16, 8], strides = [1, 1]} : vector<16x96xf32> to vector<16x8xf32>
    %88 = arith.truncf %87 : vector<16x8xf32> to vector<16x8xbf16>
    %89 = vector.extract_strided_slice %37 {offsets = [0, 48], sizes = [16, 8], strides = [1, 1]} : vector<16x96xf32> to vector<16x8xf32>
    %90 = arith.truncf %89 : vector<16x8xf32> to vector<16x8xbf16>
    %91 = vector.extract_strided_slice %37 {offsets = [0, 80], sizes = [16, 8], strides = [1, 1]} : vector<16x96xf32> to vector<16x8xf32>
    %92 = arith.truncf %91 : vector<16x8xf32> to vector<16x8xbf16>
    %cst_31 = arith.constant dense<0.000000e+00> : vector<16x16xf32>
    %93 = tpu.matmul %88, %90, %cst_31 {dimension_numbers = #tpu.dot_dimension_numbers<[1], [1], [0], [0], [0, 0, 1, 0], [], []>} : vector<16x8xbf16>, vector<16x8xbf16>, vector<16x16xf32> -> vector<16x16xf32>
    %cst_32 = arith.constant 0.353553385 : f32
    %94 = vector.broadcast %cst_32 : f32 to vector<16x16xf32>
    %95 = arith.mulf %93, %94 : vector<16x16xf32>
    %cst_33 = arith.constant -1.000000e+30 : f32
    %96 = vector.broadcast %cst_33 : f32 to vector<16x16xf32>
    %97 = arith.select %40, %95, %96 : vector<16x16xi1>, vector<16x16xf32>
    %cst_34 = arith.constant dense<0xFF800000> : vector<16xf32>
    %98 = vector.multi_reduction <maximumf>, %97, %cst_34 [1] : vector<16x16xf32> to vector<16xf32>
    %99 = vector.shape_cast %98 : vector<16xf32> to vector<16x1xf32>
    %100 = vector.broadcast %99 : vector<16x1xf32> to vector<16x16xf32>
    %101 = arith.subf %97, %100 : vector<16x16xf32>
    %102 = math.exp %101 : vector<16x16xf32>
    %cst_35 = arith.constant dense<0.000000e+00> : vector<16xf32>
    %103 = vector.multi_reduction <add>, %102, %cst_35 [1] : vector<16x16xf32> to vector<16xf32>
    %104 = vector.shape_cast %103 : vector<16xf32> to vector<16x1xf32>
    %105 = tpu.reciprocal %104 {approx = true} : vector<16x1xf32> -> vector<16x1xf32>
    %106 = vector.broadcast %105 : vector<16x1xf32> to vector<16x16xf32>
    %107 = arith.mulf %102, %106 : vector<16x16xf32>
    %108 = arith.truncf %107 : vector<16x16xf32> to vector<16x16xbf16>
    %cst_36 = arith.constant dense<0.000000e+00> : vector<16x8xf32>
    %109 = tpu.matmul %108, %92, %cst_36 {dimension_numbers = #tpu.dot_dimension_numbers<[1], [0], [0], [1], [0, 0, 1, 1], [], []>} : vector<16x16xbf16>, vector<16x8xbf16>, vector<16x8xf32> -> vector<16x8xf32>
    %110 = vector.extract_strided_slice %37 {offsets = [0, 24], sizes = [16, 8], strides = [1, 1]} : vector<16x96xf32> to vector<16x8xf32>
    %111 = arith.truncf %110 : vector<16x8xf32> to vector<16x8xbf16>
    %112 = vector.extract_strided_slice %37 {offsets = [0, 56], sizes = [16, 8], strides = [1, 1]} : vector<16x96xf32> to vector<16x8xf32>
    %113 = arith.truncf %112 : vector<16x8xf32> to vector<16x8xbf16>
    %114 = vector.extract_strided_slice %37 {offsets = [0, 88], sizes = [16, 8], strides = [1, 1]} : vector<16x96xf32> to vector<16x8xf32>
    %115 = arith.truncf %114 : vector<16x8xf32> to vector<16x8xbf16>
    %cst_37 = arith.constant dense<0.000000e+00> : vector<16x16xf32>
    %116 = tpu.matmul %111, %113, %cst_37 {dimension_numbers = #tpu.dot_dimension_numbers<[1], [1], [0], [0], [0, 0, 1, 0], [], []>} : vector<16x8xbf16>, vector<16x8xbf16>, vector<16x16xf32> -> vector<16x16xf32>
    %cst_38 = arith.constant 0.353553385 : f32
    %117 = vector.broadcast %cst_38 : f32 to vector<16x16xf32>
    %118 = arith.mulf %116, %117 : vector<16x16xf32>
    %cst_39 = arith.constant -1.000000e+30 : f32
    %119 = vector.broadcast %cst_39 : f32 to vector<16x16xf32>
    %120 = arith.select %40, %118, %119 : vector<16x16xi1>, vector<16x16xf32>
    %cst_40 = arith.constant dense<0xFF800000> : vector<16xf32>
    %121 = vector.multi_reduction <maximumf>, %120, %cst_40 [1] : vector<16x16xf32> to vector<16xf32>
    %122 = vector.shape_cast %121 : vector<16xf32> to vector<16x1xf32>
    %123 = vector.broadcast %122 : vector<16x1xf32> to vector<16x16xf32>
    %124 = arith.subf %120, %123 : vector<16x16xf32>
    %125 = math.exp %124 : vector<16x16xf32>
    %cst_41 = arith.constant dense<0.000000e+00> : vector<16xf32>
    %126 = vector.multi_reduction <add>, %125, %cst_41 [1] : vector<16x16xf32> to vector<16xf32>
    %127 = vector.shape_cast %126 : vector<16xf32> to vector<16x1xf32>
    %128 = tpu.reciprocal %127 {approx = true} : vector<16x1xf32> -> vector<16x1xf32>
    %129 = vector.broadcast %128 : vector<16x1xf32> to vector<16x16xf32>
    %130 = arith.mulf %125, %129 : vector<16x16xf32>
    %131 = arith.truncf %130 : vector<16x16xf32> to vector<16x16xbf16>
    %cst_42 = arith.constant dense<0.000000e+00> : vector<16x8xf32>
    %132 = tpu.matmul %131, %115, %cst_42 {dimension_numbers = #tpu.dot_dimension_numbers<[1], [0], [0], [1], [0, 0, 1, 1], [], []>} : vector<16x16xbf16>, vector<16x8xbf16>, vector<16x8xf32> -> vector<16x8xf32>
    %133 = tpu.concatenate %63, %86, %109, %132 in 1 : vector<16x8xf32>, vector<16x8xf32>, vector<16x8xf32>, vector<16x8xf32> -> vector<16x32xf32>
    %134 = arith.truncf %133 : vector<16x32xf32> to vector<16x32xbf16>
    %c0_43 = arith.constant 0 : index
    %c0_44 = arith.constant 0 : index
    %c0_45 = arith.constant 0 : index
    %135 = vector.load %arg10[%c0_43, %c0_44, %c0_45] : memref<1x32x32xbf16, #tpu.memory_space<vmem>>, vector<1x32x32xbf16>
    %136 = vector.shape_cast %135 : vector<1x32x32xbf16> to vector<32x32xbf16>
    %cst_46 = arith.constant dense<0.000000e+00> : vector<16x32xf32>
    %137 = tpu.matmul %134, %136, %cst_46 {dimension_numbers = #tpu.dot_dimension_numbers<[1], [0], [0], [1], [0, 0, 1, 1], [], []>} : vector<16x32xbf16>, vector<32x32xbf16>, vector<16x32xf32> -> vector<16x32xf32>
    %c0_47 = arith.constant 0 : index
    %c0_48 = arith.constant 0 : index
    %c0_49 = arith.constant 0 : index
    %138 = vector.load %arg11[%c0_47, %c0_48, %c0_49] : memref<1x1x32xf32, #tpu.memory_space<vmem>>, vector<1x1x32xf32>
    %139 = vector.shape_cast %138 : vector<1x1x32xf32> to vector<1x32xf32>
    %140 = vector.broadcast %139 : vector<1x32xf32> to vector<16x32xf32>
    %141 = arith.addf %137, %140 : vector<16x32xf32>
    %142 = arith.addf %3, %141 : vector<16x32xf32>
    %c0_50 = arith.constant 0 : index
    %c0_51 = arith.constant 0 : index
    %c0_52 = arith.constant 0 : index
    %143 = vector.load %arg12[%c0_50, %c0_51, %c0_52] : memref<1x1x32xf32, #tpu.memory_space<vmem>>, vector<1x1x32xf32>
    %144 = vector.shape_cast %143 : vector<1x1x32xf32> to vector<1x32xf32>
    %c0_53 = arith.constant 0 : index
    %c0_54 = arith.constant 0 : index
    %c0_55 = arith.constant 0 : index
    %145 = vector.load %arg13[%c0_53, %c0_54, %c0_55] : memref<1x1x32xf32, #tpu.memory_space<vmem>>, vector<1x1x32xf32>
    %146 = vector.shape_cast %145 : vector<1x1x32xf32> to vector<1x32xf32>
    %cst_56 = arith.constant dense<0.000000e+00> : vector<16xf32>
    %147 = vector.multi_reduction <add>, %142, %cst_56 [1] : vector<16x32xf32> to vector<16xf32>
    %148 = vector.shape_cast %147 : vector<16xf32> to vector<16x1xf32>
    %cst_57 = arith.constant 3.200000e+01 : f32
    %149 = vector.broadcast %cst_57 : f32 to vector<16x1xf32>
    %150 = arith.divf %148, %149 : vector<16x1xf32>
    %151 = vector.broadcast %150 : vector<16x1xf32> to vector<16x32xf32>
    %152 = arith.subf %142, %151 : vector<16x32xf32>
    %153 = arith.mulf %152, %152 : vector<16x32xf32>
    %cst_58 = arith.constant dense<0.000000e+00> : vector<16xf32>
    %154 = vector.multi_reduction <add>, %153, %cst_58 [1] : vector<16x32xf32> to vector<16xf32>
    %155 = vector.shape_cast %154 : vector<16xf32> to vector<16x1xf32>
    %cst_59 = arith.constant 3.200000e+01 : f32
    %156 = vector.broadcast %cst_59 : f32 to vector<16x1xf32>
    %157 = arith.divf %155, %156 : vector<16x1xf32>
    %158 = vector.broadcast %150 : vector<16x1xf32> to vector<16x32xf32>
    %159 = arith.subf %142, %158 : vector<16x32xf32>
    %cst_60 = arith.constant 9.99999974E-6 : f32
    %160 = vector.broadcast %cst_60 : f32 to vector<16x1xf32>
    %161 = arith.addf %157, %160 : vector<16x1xf32>
    %162 = math.rsqrt %161 : vector<16x1xf32>
    %163 = vector.broadcast %162 : vector<16x1xf32> to vector<16x32xf32>
    %164 = arith.mulf %159, %163 : vector<16x32xf32>
    %165 = vector.broadcast %144 : vector<1x32xf32> to vector<16x32xf32>
    %166 = arith.mulf %164, %165 : vector<16x32xf32>
    %167 = vector.broadcast %146 : vector<1x32xf32> to vector<16x32xf32>
    %168 = arith.addf %166, %167 : vector<16x32xf32>
    %169 = arith.truncf %168 : vector<16x32xf32> to vector<16x32xbf16>
    %c0_61 = arith.constant 0 : index
    %c0_62 = arith.constant 0 : index
    %c0_63 = arith.constant 0 : index
    %170 = vector.load %arg14[%c0_61, %c0_62, %c0_63] : memref<1x32x128xbf16, #tpu.memory_space<vmem>>, vector<1x32x128xbf16>
    %171 = vector.shape_cast %170 : vector<1x32x128xbf16> to vector<32x128xbf16>
    %cst_64 = arith.constant dense<0.000000e+00> : vector<16x128xf32>
    %172 = tpu.matmul %169, %171, %cst_64 {dimension_numbers = #tpu.dot_dimension_numbers<[1], [0], [0], [1], [0, 0, 1, 1], [], []>} : vector<16x32xbf16>, vector<32x128xbf16>, vector<16x128xf32> -> vector<16x128xf32>
    %c0_65 = arith.constant 0 : index
    %c0_66 = arith.constant 0 : index
    %c0_67 = arith.constant 0 : index
    %173 = vector.load %arg15[%c0_65, %c0_66, %c0_67] : memref<1x1x128xf32, #tpu.memory_space<vmem>>, vector<1x1x128xf32>
    %174 = vector.shape_cast %173 : vector<1x1x128xf32> to vector<1x128xf32>
    %175 = vector.broadcast %174 : vector<1x128xf32> to vector<16x128xf32>
    %176 = arith.addf %172, %175 : vector<16x128xf32>
    %cst_68 = arith.constant 5.000000e-01 : f32
    %177 = vector.broadcast %cst_68 : f32 to vector<16x128xf32>
    %178 = arith.mulf %177, %176 : vector<16x128xf32>
    %179 = arith.mulf %176, %176 : vector<16x128xf32>
    %180 = arith.mulf %176, %179 : vector<16x128xf32>
    %cst_69 = arith.constant 4.471500e-02 : f32
    %181 = vector.broadcast %cst_69 : f32 to vector<16x128xf32>
    %182 = arith.mulf %181, %180 : vector<16x128xf32>
    %183 = arith.addf %176, %182 : vector<16x128xf32>
    %cst_70 = arith.constant 0.797884583 : f32
    %184 = vector.broadcast %cst_70 : f32 to vector<16x128xf32>
    %185 = arith.mulf %184, %183 : vector<16x128xf32>
    %186 = math.tanh %185 : vector<16x128xf32>
    %cst_71 = arith.constant 1.000000e+00 : f32
    %187 = vector.broadcast %cst_71 : f32 to vector<16x128xf32>
    %188 = arith.addf %187, %186 : vector<16x128xf32>
    %189 = arith.mulf %178, %188 : vector<16x128xf32>
    %190 = arith.truncf %189 : vector<16x128xf32> to vector<16x128xbf16>
    %c0_72 = arith.constant 0 : index
    %c0_73 = arith.constant 0 : index
    %c0_74 = arith.constant 0 : index
    %191 = vector.load %arg16[%c0_72, %c0_73, %c0_74] : memref<1x128x32xbf16, #tpu.memory_space<vmem>>, vector<1x128x32xbf16>
    %192 = vector.shape_cast %191 : vector<1x128x32xbf16> to vector<128x32xbf16>
    %cst_75 = arith.constant dense<0.000000e+00> : vector<16x32xf32>
    %193 = tpu.matmul %190, %192, %cst_75 {dimension_numbers = #tpu.dot_dimension_numbers<[1], [0], [0], [1], [0, 0, 1, 1], [], []>} : vector<16x128xbf16>, vector<128x32xbf16>, vector<16x32xf32> -> vector<16x32xf32>
    %c0_76 = arith.constant 0 : index
    %c0_77 = arith.constant 0 : index
    %c0_78 = arith.constant 0 : index
    %194 = vector.load %arg17[%c0_76, %c0_77, %c0_78] : memref<1x1x32xf32, #tpu.memory_space<vmem>>, vector<1x1x32xf32>
    %195 = vector.shape_cast %194 : vector<1x1x32xf32> to vector<1x32xf32>
    %196 = vector.broadcast %195 : vector<1x32xf32> to vector<16x32xf32>
    %197 = arith.addf %193, %196 : vector<16x32xf32>
    %198 = arith.addf %142, %197 : vector<16x32xf32>
    %c1_i32 = arith.constant 1 : i32
    %199 = arith.cmpi slt, %arg1, %c1_i32 : i32
    %200 = arith.extui %199 : i1 to i32
    %c0_i32_79 = arith.constant 0 : i32
    %201 = arith.cmpi ne, %200, %c0_i32_79 : i32
    scf.if %201 {
      %c0_82 = arith.constant 0 : index
      %c0_83 = arith.constant 0 : index
      %205 = vector.load %arg22[%c0_82, %c0_83] : memref<16x32xf32, #tpu.memory_space<vmem>>, vector<16x32xf32>
      tpu.vector_store %arg22[%c0_82, %c0_83], %198 {strides = array<i32>} : memref<16x32xf32, #tpu.memory_space<vmem>>, vector<16x32xf32>,
    } else {
    }
    %c1_i32_80 = arith.constant 1 : i32
    %202 = arith.cmpi eq, %arg1, %c1_i32_80 : i32
    %203 = arith.extui %202 : i1 to i32
    %c0_i32_81 = arith.constant 0 : i32
    %204 = arith.cmpi ne, %203, %c0_i32_81 : i32
    scf.if %204 {
      %c0_82 = arith.constant 0 : index
      %c0_83 = arith.constant 0 : index
      %205 = vector.load %arg18[%c0_82, %c0_83] : memref<1x32xf32, #tpu.memory_space<vmem>>, vector<1x32xf32>
      %c0_84 = arith.constant 0 : index
      %c0_85 = arith.constant 0 : index
      %206 = vector.load %arg19[%c0_84, %c0_85] : memref<1x32xf32, #tpu.memory_space<vmem>>, vector<1x32xf32>
      %cst_86 = arith.constant dense<0.000000e+00> : vector<16xf32>
      %207 = vector.multi_reduction <add>, %198, %cst_86 [1] : vector<16x32xf32> to vector<16xf32>
      %208 = vector.shape_cast %207 : vector<16xf32> to vector<16x1xf32>
      %cst_87 = arith.constant 3.200000e+01 : f32
      %209 = vector.broadcast %cst_87 : f32 to vector<16x1xf32>
      %210 = arith.divf %208, %209 : vector<16x1xf32>
      %211 = vector.broadcast %210 : vector<16x1xf32> to vector<16x32xf32>
      %212 = arith.subf %198, %211 : vector<16x32xf32>
      %213 = arith.mulf %212, %212 : vector<16x32xf32>
      %cst_88 = arith.constant dense<0.000000e+00> : vector<16xf32>
      %214 = vector.multi_reduction <add>, %213, %cst_88 [1] : vector<16x32xf32> to vector<16xf32>
      %215 = vector.shape_cast %214 : vector<16xf32> to vector<16x1xf32>
      %cst_89 = arith.constant 3.200000e+01 : f32
      %216 = vector.broadcast %cst_89 : f32 to vector<16x1xf32>
      %217 = arith.divf %215, %216 : vector<16x1xf32>
      %218 = vector.broadcast %210 : vector<16x1xf32> to vector<16x32xf32>
      %219 = arith.subf %198, %218 : vector<16x32xf32>
      %cst_90 = arith.constant 9.99999974E-6 : f32
      %220 = vector.broadcast %cst_90 : f32 to vector<16x1xf32>
      %221 = arith.addf %217, %220 : vector<16x1xf32>
      %222 = math.rsqrt %221 : vector<16x1xf32>
      %223 = vector.broadcast %222 : vector<16x1xf32> to vector<16x32xf32>
      %224 = arith.mulf %219, %223 : vector<16x32xf32>
      %225 = vector.broadcast %205 : vector<1x32xf32> to vector<16x32xf32>
      %226 = arith.mulf %224, %225 : vector<16x32xf32>
      %227 = vector.broadcast %206 : vector<1x32xf32> to vector<16x32xf32>
      %228 = arith.addf %226, %227 : vector<16x32xf32>
      %c0_91 = arith.constant 0 : index
      %c0_92 = arith.constant 0 : index
      %229 = vector.load %arg20[%c0_91, %c0_92] : memref<1x32xf32, #tpu.memory_space<vmem>>, vector<1x32xf32>
      %230 = vector.broadcast %229 : vector<1x32xf32> to vector<16x32xf32>
      %231 = arith.mulf %228, %230 : vector<16x32xf32>
      %cst_93 = arith.constant dense<0.000000e+00> : vector<16xf32>
      %232 = vector.multi_reduction <add>, %231, %cst_93 [1] : vector<16x32xf32> to vector<16xf32>
      %233 = vector.shape_cast %232 : vector<16xf32> to vector<16x1xf32>
      %234 = tpu.transpose %233, [1, 0] : vector<16x1xf32> -> vector<1x16xf32>
      %c0_94 = arith.constant 0 : index
      %c0_95 = arith.constant 0 : index
      %c0_96 = arith.constant 0 : index
      %235 = vector.load %arg21[%c0_94, %c0_95, %c0_96] : memref<1x1x16xf32, #tpu.memory_space<vmem>>, vector<1x1x16xf32>
      %236 = vector.shape_cast %235 : vector<1x1x16xf32> to vector<1x16xf32>
      %237 = vector.shape_cast %234 : vector<1x16xf32> to vector<1x1x16xf32>
      tpu.vector_store %arg21[%c0_94, %c0_95, %c0_96], %237 {strides = array<i32>} : memref<1x1x16xf32, #tpu.memory_space<vmem>>, vector<1x1x16xf32>,
    } else {
    }
    return
  }
  func.func @transform_0(%arg0: i32, %arg1: i32) -> (i32, i32, i32) {
    %c0_i32 = arith.constant 0 : i32
    %c0_i32_0 = arith.constant 0 : i32
    %c0_i32_1 = arith.constant 0 : i32
    return %arg0, %c0_i32, %c0_i32_0 : i32, i32, i32
  }
  func.func @transform_1(%arg0: i32, %arg1: i32) -> (i32, i32) {
    %c0_i32 = arith.constant 0 : i32
    %c0_i32_0 = arith.constant 0 : i32
    %c0_i32_1 = arith.constant 0 : i32
    return %c0_i32, %c0_i32_0 : i32, i32
  }
  func.func @transform_2(%arg0: i32, %arg1: i32) -> (i32, i32) {
    %c0_i32 = arith.constant 0 : i32
    %c0_i32_0 = arith.constant 0 : i32
    %c0_i32_1 = arith.constant 0 : i32
    return %c0_i32, %c0_i32_0 : i32, i32
  }
  func.func @transform_3(%arg0: i32, %arg1: i32) -> (i32, i32) {
    %c0_i32 = arith.constant 0 : i32
    %c0_i32_0 = arith.constant 0 : i32
    %c0_i32_1 = arith.constant 0 : i32
    return %c0_i32, %c0_i32_0 : i32, i32
  }
  func.func @transform_4(%arg0: i32, %arg1: i32) -> (i32, i32, i32) {
    %c0_i32 = arith.constant 0 : i32
    %c0_i32_0 = arith.constant 0 : i32
    %c0_i32_1 = arith.constant 0 : i32
    return %arg1, %c0_i32, %c0_i32_0 : i32, i32, i32
  }
  func.func @transform_5(%arg0: i32, %arg1: i32) -> (i32, i32, i32) {
    %c0_i32 = arith.constant 0 : i32
    %c0_i32_0 = arith.constant 0 : i32
    %c0_i32_1 = arith.constant 0 : i32
    return %arg1, %c0_i32, %c0_i32_0 : i32, i32, i32
  }
  func.func @transform_6(%arg0: i32, %arg1: i32) -> (i32, i32, i32) {
    %c0_i32 = arith.constant 0 : i32
    %c0_i32_0 = arith.constant 0 : i32
    %c0_i32_1 = arith.constant 0 : i32
    return %arg1, %c0_i32, %c0_i32_0 : i32, i32, i32
  }
  func.func @transform_7(%arg0: i32, %arg1: i32) -> (i32, i32, i32) {
    %c0_i32 = arith.constant 0 : i32
    %c0_i32_0 = arith.constant 0 : i32
    %c0_i32_1 = arith.constant 0 : i32
    return %arg1, %c0_i32, %c0_i32_0 : i32, i32, i32
  }
  func.func @transform_8(%arg0: i32, %arg1: i32) -> (i32, i32, i32) {
    %c0_i32 = arith.constant 0 : i32
    %c0_i32_0 = arith.constant 0 : i32
    %c0_i32_1 = arith.constant 0 : i32
    return %arg1, %c0_i32, %c0_i32_0 : i32, i32, i32
  }
  func.func @transform_9(%arg0: i32, %arg1: i32) -> (i32, i32, i32) {
    %c0_i32 = arith.constant 0 : i32
    %c0_i32_0 = arith.constant 0 : i32
    %c0_i32_1 = arith.constant 0 : i32
    return %arg1, %c0_i32, %c0_i32_0 : i32, i32, i32
  }
  func.func @transform_10(%arg0: i32, %arg1: i32) -> (i32, i32, i32) {
    %c0_i32 = arith.constant 0 : i32
    %c0_i32_0 = arith.constant 0 : i32
    %c0_i32_1 = arith.constant 0 : i32
    return %arg1, %c0_i32, %c0_i32_0 : i32, i32, i32
  }
  func.func @transform_11(%arg0: i32, %arg1: i32) -> (i32, i32, i32) {
    %c0_i32 = arith.constant 0 : i32
    %c0_i32_0 = arith.constant 0 : i32
    %c0_i32_1 = arith.constant 0 : i32
    return %arg1, %c0_i32, %c0_i32_0 : i32, i32, i32
  }
  func.func @transform_12(%arg0: i32, %arg1: i32) -> (i32, i32, i32) {
    %c0_i32 = arith.constant 0 : i32
    %c0_i32_0 = arith.constant 0 : i32
    %c0_i32_1 = arith.constant 0 : i32
    return %arg1, %c0_i32, %c0_i32_0 : i32, i32, i32
  }
  func.func @transform_13(%arg0: i32, %arg1: i32) -> (i32, i32, i32) {
    %c0_i32 = arith.constant 0 : i32
    %c0_i32_0 = arith.constant 0 : i32
    %c0_i32_1 = arith.constant 0 : i32
    return %arg1, %c0_i32, %c0_i32_0 : i32, i32, i32
  }
  func.func @transform_14(%arg0: i32, %arg1: i32) -> (i32, i32, i32) {
    %c0_i32 = arith.constant 0 : i32
    %c0_i32_0 = arith.constant 0 : i32
    %c0_i32_1 = arith.constant 0 : i32
    return %arg1, %c0_i32, %c0_i32_0 : i32, i32, i32
  }
  func.func @transform_15(%arg0: i32, %arg1: i32) -> (i32, i32, i32) {
    %c0_i32 = arith.constant 0 : i32
    %c0_i32_0 = arith.constant 0 : i32
    %c0_i32_1 = arith.constant 0 : i32
    return %arg1, %c0_i32, %c0_i32_0 : i32, i32, i32
  }
  func.func @transform_16(%arg0: i32, %arg1: i32) -> (i32, i32) {
    %c0_i32 = arith.constant 0 : i32
    %c0_i32_0 = arith.constant 0 : i32
    %c0_i32_1 = arith.constant 0 : i32
    return %c0_i32, %c0_i32_0 : i32, i32
  }
  func.func @transform_17(%arg0: i32, %arg1: i32) -> (i32, i32) {
    %c0_i32 = arith.constant 0 : i32
    %c0_i32_0 = arith.constant 0 : i32
    %c0_i32_1 = arith.constant 0 : i32
    return %c0_i32, %c0_i32_0 : i32, i32
  }
  func.func @transform_18(%arg0: i32, %arg1: i32) -> (i32, i32) {
    %c0_i32 = arith.constant 0 : i32
    %c0_i32_0 = arith.constant 0 : i32
    %c0_i32_1 = arith.constant 0 : i32
    return %c0_i32, %c0_i32_0 : i32, i32
  }
  func.func @transform_19(%arg0: i32, %arg1: i32) -> (i32, i32, i32) {
    %c0_i32 = arith.constant 0 : i32
    %c0_i32_0 = arith.constant 0 : i32
    %c0_i32_1 = arith.constant 0 : i32
    return %arg0, %c0_i32, %c0_i32_0 : i32, i32, i32
  }
}

</mosaic_0001>

<llo_original>
// kernel: tpu_custom_call.1
$region0: #{tpu_custom_call.1}
  #allocation0 [shape = 'u32[]', space=smem, size = 0x4, offset = 0x4, fixed_abs, tag = 'smem constant byte address 0x4 - core index']
  #allocation1 [shape = 'u32[144,128]{1,0:T(1,128)}', space=vmem, size = 0x12000, scoped, tag = 'internal scratch']
  #allocation2 [shape = 'f32[16,32]{1,0:T(8,128)}', space=vmem, size = 0x2000, scoped, tag = 'scratch operand']
  %s0 = inlined_call_operand.vmem [shape: f32[2,16,8], index: 0, kind: input, shape index: {}]
  %s1 = inlined_call_operand.vmem [shape: f32[8,32], index: 1, kind: input, shape index: {}]
  %s2 = inlined_call_operand.vmem [shape: f32[1,32], index: 2, kind: input, shape index: {}]
  %s3 = inlined_call_operand.vmem [shape: f32[16,32], index: 3, kind: input, shape index: {}]
  %s4 = inlined_call_operand.vmem [shape: f32[2,1,32], index: 4, kind: input, shape index: {}]
  %s5 = inlined_call_operand.vmem [shape: f32[2,1,32], index: 5, kind: input, shape index: {}]
  %s6 = inlined_call_operand.vmem [shape: bf16[2,32,96], index: 6, kind: input, shape index: {}]
  %s7 = inlined_call_operand.vmem [shape: f32[2,1,96], index: 7, kind: input, shape index: {}]
  %s8 = inlined_call_operand.vmem [shape: bf16[2,32,32], index: 8, kind: input, shape index: {}]
  %s9 = inlined_call_operand.vmem [shape: f32[2,1,32], index: 9, kind: input, shape index: {}]
  %s10 = inlined_call_operand.vmem [shape: f32[2,1,32], index: 10, kind: input, shape index: {}]
  %s11 = inlined_call_operand.vmem [shape: f32[2,1,32], index: 11, kind: input, shape index: {}]
  %s12 = inlined_call_operand.vmem [shape: bf16[2,32,128], index: 12, kind: input, shape index: {}]
  %s13 = inlined_call_operand.vmem [shape: f32[2,1,128], index: 13, kind: input, shape index: {}]
  %s14 = inlined_call_operand.vmem [shape: bf16[2,128,32], index: 14, kind: input, shape index: {}]
  %s15 = inlined_call_operand.vmem [shape: f32[2,1,32], index: 15, kind: input, shape index: {}]
  %s16 = inlined_call_operand.vmem [shape: f32[1,32], index: 16, kind: input, shape index: {}]
  %s17 = inlined_call_operand.vmem [shape: f32[1,32], index: 17, kind: input, shape index: {}]
  %s18 = inlined_call_operand.vmem [shape: f32[1,32], index: 18, kind: input, shape index: {}]
  %s19 = inlined_call_operand.hbm [shape: f32[2,1,16], index: 19, kind: output, shape index: {}]
  %s20 = sld [smem:[#allocation0]]
  $region121: #{tpu_custom_call.1} parent=0
    _
  %s22 = ssub.s32 1, %s20
  %s23 = scalar_select 0, %s22, %s20
  $region1: #{tpu_custom_call.1} parent=0
    #allocation3 [shape = 'u8[1024]{0}', space=vmem, size = 0x400, scoped, tag = 'output window, operand 0']
    #allocation4 [shape = 's32[2]{0}', space=sflag, size = 0x8, scoped, tag = 'scoped memory for tpu_custom_call.1']
    %24 = vsyncpa [#allocation4], 0
    %s25 = scalar_lea.sflag [#allocation4], 1
    %26 = vsyncpa %s25, 0
    loop: start=0, step=1, limit=6
    $region2: #{tpu_custom_call.1} parent=1 // loop_pre_header
      _
    $region3: #{tpu_custom_call.1} parent=1 // loop_header
      %s28 = sphi 0, %s32
      %p29 = scmp.ge.s32.totalorder %s28, 6
      %s35 = sphi 0, %s47
      %s36 = sphi 0, %s43
      %s37 = sphi 0, %s35
      %s38 = sphi 0, %s36
      %s39 = sphi 0, %s37
      %s40 = sphi 0, %s38
      %s50 = sphi 0, %s52
      %s53 = sphi 0, %s50
      %s54 = sphi 0, %s53
      %s70 = sphi 0, %s54
      %s74 = sphi 0, %s74
      %s76 = sphi 0, %s74
      %s77 = sphi 0, %s76
      %s91 = sphi 0, %s77
      %s95 = sphi 0, %s95
      %s97 = sphi 0, %s95
      %s98 = sphi 0, %s97
      %s112 = sphi 0, %s98
      %s116 = sphi 0, %s116
      %s118 = sphi 0, %s116
      %s119 = sphi 0, %s118
      %s133 = sphi 0, %s119
      %s139 = sphi 0, %s141
      %s142 = sphi 0, %s139
      %s143 = sphi 0, %s142
      %s159 = sphi 0, %s143
      %s165 = sphi 0, %s167
      %s168 = sphi 0, %s165
      %s169 = sphi 0, %s168
      %s185 = sphi 0, %s169
      %s191 = sphi 0, %s193
      %s194 = sphi 0, %s191
      %s195 = sphi 0, %s194
      %s211 = sphi 0, %s195
      %s217 = sphi 0, %s219
      %s220 = sphi 0, %s217
      %s221 = sphi 0, %s220
      %s237 = sphi 0, %s221
      %s243 = sphi 0, %s245
      %s246 = sphi 0, %s243
      %s247 = sphi 0, %s246
      %s263 = sphi 0, %s247
      %s269 = sphi 0, %s271
      %s272 = sphi 0, %s269
      %s273 = sphi 0, %s272
      %s289 = sphi 0, %s273
      %s295 = sphi 0, %s297
      %s298 = sphi 0, %s295
      %s299 = sphi 0, %s298
      %s315 = sphi 0, %s299
      %s321 = sphi 0, %s323
      %s324 = sphi 0, %s321
      %s325 = sphi 0, %s324
      %s341 = sphi 0, %s325
      %s347 = sphi 0, %s349
      %s350 = sphi 0, %s347
      %s351 = sphi 0, %s350
      %s367 = sphi 0, %s351
      %s373 = sphi 0, %s375
      %s376 = sphi 0, %s373
      %s377 = sphi 0, %s376
      %s393 = sphi 0, %s377
      %s399 = sphi 0, %s401
      %s402 = sphi 0, %s399
      %s403 = sphi 0, %s402
      %s419 = sphi 0, %s403
      %s425 = sphi 0, %s427
      %s428 = sphi 0, %s425
      %s429 = sphi 0, %s428
      %s445 = sphi 0, %s429
      %s449 = sphi 0, %s449
      %s451 = sphi 0, %s449
      %s452 = sphi 0, %s451
      %s466 = sphi 0, %s452
      %s470 = sphi 0, %s470
      %s472 = sphi 0, %s470
      %s473 = sphi 0, %s472
      %s487 = sphi 0, %s473
      %s491 = sphi 0, %s491
      %s493 = sphi 0, %s491
      %s494 = sphi 0, %s493
      %s508 = sphi 0, %s494
      %s514 = sphi 0, %s516
      %s517 = sphi 0, %s514
      %s518 = sphi 0, %s517
      %s534 = sphi 0, %s518
    $region4: #{tpu_custom_call.1} parent=1 // loop_header_branch
      %31 = sbr.rel (%p29) target = $region8
    $region5: #{tpu_custom_call.1} parent=1 // loop_body
      %s33 = ssub.s32 %s28, 1
      %s34 = ssub.s32 %s28, 2
      %s41 = sadd.s32 1, %s36
      %p42 = scmp.ge.s32.totalorder %s41, 2
      %s43 = scalar_select %p42, 0, %s41
      %s44 = sadd.s32 1, %s35
      %s45 = scalar_select %p42, %s44, %s35
      %p46 = scmp.ge.s32.totalorder %s45, 2
      %s47 = scalar_select %p46, 0, %s45
      %s48 = ssub.s32 %s35, %s47
      %p49 = scmp.eq.s32.totalorder %s48, 0
      %s51 = sadd.s32 %s50, 1
      %s52 = scalar_select %p49, %s50, %s51
      %p55 = pneg %p49
      %p56 = scmp.eq.s32.totalorder %s28, 3
      %p57 = por %p55, %p56
      %p58 = scmp.ne.s32.totalorder %s50, %s53
      %p59 = scmp.eq.s32.totalorder %s28, 0
      %p60 = por %p58, %p59
      %p61 = scmp.ne.s32.totalorder %s50, %s53
      %p62 = scmp.eq.s32.totalorder %s33, 3
      %p63 = por %p61, %p62
      %p64 = scmp.ne.s32.totalorder %s53, %s54
      %p65 = scmp.eq.s32.totalorder %s33, 0
      %p66 = por %p64, %p65
      %p67 = scmp.ne.s32.totalorder %s53, %s54
      %p68 = scmp.eq.s32.totalorder %s34, 3
      %p69 = por %p67, %p68
      %p71 = scmp.ne.s32.totalorder %s54, %s70
      %p72 = scmp.eq.s32.totalorder %s34, 0
      %p73 = por %p71, %p72
      %s75 = sadd.s32 %s74, 1
      %p78 = scmp.eq.s32.totalorder %s28, 3
      %p79 = scmp.ne.s32.totalorder %s74, %s76
      %p80 = scmp.eq.s32.totalorder %s28, 0
      %p81 = por %p79, %p80
      %p82 = scmp.ne.s32.totalorder %s74, %s76
      %p83 = scmp.eq.s32.totalorder %s33, 3
      %p84 = por %p82, %p83
      %p85 = scmp.ne.s32.totalorder %s76, %s77
      %p86 = scmp.eq.s32.totalorder %s33, 0
      %p87 = por %p85, %p86
      %p88 = scmp.ne.s32.totalorder %s76, %s77
      %p89 = scmp.eq.s32.totalorder %s34, 3
      %p90 = por %p88, %p89
      %p92 = scmp.ne.s32.totalorder %s77, %s91
      %p93 = scmp.eq.s32.totalorder %s34, 0
      %p94 = por %p92, %p93
      %s96 = sadd.s32 %s95, 1
      %p99 = scmp.eq.s32.totalorder %s28, 3
      %p100 = scmp.ne.s32.totalorder %s95, %s97
      %p101 = scmp.eq.s32.totalorder %s28, 0
      %p102 = por %p100, %p101
      %p103 = scmp.ne.s32.totalorder %s95, %s97
      %p104 = scmp.eq.s32.totalorder %s33, 3
      %p105 = por %p103, %p104
      %p106 = scmp.ne.s32.totalorder %s97, %s98
      %p107 = scmp.eq.s32.totalorder %s33, 0
      %p108 = por %p106, %p107
      %p109 = scmp.ne.s32.totalorder %s97, %s98
      %p110 = scmp.eq.s32.totalorder %s34, 3
      %p111 = por %p109, %p110
      %p113 = scmp.ne.s32.totalorder %s98, %s112
      %p114 = scmp.eq.s32.totalorder %s34, 0
      %p115 = por %p113, %p114
      %s117 = sadd.s32 %s116, 1
      %p120 = scmp.eq.s32.totalorder %s28, 3
      %p121 = scmp.ne.s32.totalorder %s116, %s118
      %p122 = scmp.eq.s32.totalorder %s28, 0
      %p123 = por %p121, %p122
      %p124 = scmp.ne.s32.totalorder %s116, %s118
      %p125 = scmp.eq.s32.totalorder %s33, 3
      %p126 = por %p124, %p125
      %p127 = scmp.ne.s32.totalorder %s118, %s119
      %p128 = scmp.eq.s32.totalorder %s33, 0
      %p129 = por %p127, %p128
      %p130 = scmp.ne.s32.totalorder %s118, %s119
      %p131 = scmp.eq.s32.totalorder %s34, 3
      %p132 = por %p130, %p131
      %p134 = scmp.ne.s32.totalorder %s119, %s133
      %p135 = scmp.eq.s32.totalorder %s34, 0
      %p136 = por %p134, %p135
      %s137 = ssub.s32 %s36, %s43
      %p138 = scmp.eq.s32.totalorder %s137, 0
      %s140 = sadd.s32 %s139, 1
      %s141 = scalar_select %p138, %s139, %s140
      %p144 = pneg %p138
      %p145 = scmp.eq.s32.totalorder %s28, 3
      %p146 = por %p144, %p145
      %p147 = scmp.ne.s32.totalorder %s139, %s142
      %p148 = scmp.eq.s32.totalorder %s28, 0
      %p149 = por %p147, %p148
      %p150 = scmp.ne.s32.totalorder %s139, %s142
      %p151 = scmp.eq.s32.totalorder %s33, 3
      %p152 = por %p150, %p151
      %p153 = scmp.ne.s32.totalorder %s142, %s143
      %p154 = scmp.eq.s32.totalorder %s33, 0
      %p155 = por %p153, %p154
      %p156 = scmp.ne.s32.totalorder %s142, %s143
      %p157 = scmp.eq.s32.totalorder %s34, 3
      %p158 = por %p156, %p157
      %p160 = scmp.ne.s32.totalorder %s143, %s159
      %p161 = scmp.eq.s32.totalorder %s34, 0
      %p162 = por %p160, %p161
      %s163 = ssub.s32 %s36, %s43
      %p164 = scmp.eq.s32.totalorder %s163, 0
      %s166 = sadd.s32 %s165, 1
      %s167 = scalar_select %p164, %s165, %s166
      %p170 = pneg %p164
      %p171 = scmp.eq.s32.totalorder %s28, 3
      %p172 = por %p170, %p171
      %p173 = scmp.ne.s32.totalorder %s165, %s168
      %p174 = scmp.eq.s32.totalorder %s28, 0
      %p175 = por %p173, %p174
      %p176 = scmp.ne.s32.totalorder %s165, %s168
      %p177 = scmp.eq.s32.totalorder %s33, 3
      %p178 = por %p176, %p177
      %p179 = scmp.ne.s32.totalorder %s168, %s169
      %p180 = scmp.eq.s32.totalorder %s33, 0
      %p181 = por %p179, %p180
      %p182 = scmp.ne.s32.totalorder %s168, %s169
      %p183 = scmp.eq.s32.totalorder %s34, 3
      %p184 = por %p182, %p183
      %p186 = scmp.ne.s32.totalorder %s169, %s185
      %p187 = scmp.eq.s32.totalorder %s34, 0
      %p188 = por %p186, %p187
      %s189 = ssub.s32 %s36, %s43
      %p190 = scmp.eq.s32.totalorder %s189, 0
      %s192 = sadd.s32 %s191, 1
      %s193 = scalar_select %p190, %s191, %s192
      %p196 = pneg %p190
      %p197 = scmp.eq.s32.totalorder %s28, 3
      %p198 = por %p196, %p197
      %p199 = scmp.ne.s32.totalorder %s191, %s194
      %p200 = scmp.eq.s32.totalorder %s28, 0
      %p201 = por %p199, %p200
      %p202 = scmp.ne.s32.totalorder %s191, %s194
      %p203 = scmp.eq.s32.totalorder %s33, 3
      %p204 = por %p202, %p203
      %p205 = scmp.ne.s32.totalorder %s194, %s195
      %p206 = scmp.eq.s32.totalorder %s33, 0
      %p207 = por %p205, %p206
      %p208 = scmp.ne.s32.totalorder %s194, %s195
      %p209 = scmp.eq.s32.totalorder %s34, 3
      %p210 = por %p208, %p209
      %p212 = scmp.ne.s32.totalorder %s195, %s211
      %p213 = scmp.eq.s32.totalorder %s34, 0
      %p214 = por %p212, %p213
      %s215 = ssub.s32 %s36, %s43
      %p216 = scmp.eq.s32.totalorder %s215, 0
      %s218 = sadd.s32 %s217, 1
      %s219 = scalar_select %p216, %s217, %s218
      %p222 = pneg %p216
      %p223 = scmp.eq.s32.totalorder %s28, 3
      %p224 = por %p222, %p223
      %p225 = scmp.ne.s32.totalorder %s217, %s220
      %p226 = scmp.eq.s32.totalorder %s28, 0
      %p227 = por %p225, %p226
      %p228 = scmp.ne.s32.totalorder %s217, %s220
      %p229 = scmp.eq.s32.totalorder %s33, 3
      %p230 = por %p228, %p229
      %p231 = scmp.ne.s32.totalorder %s220, %s221
      %p232 = scmp.eq.s32.totalorder %s33, 0
      %p233 = por %p231, %p232
      %p234 = scmp.ne.s32.totalorder %s220, %s221
      %p235 = scmp.eq.s32.totalorder %s34, 3
      %p236 = por %p234, %p235
      %p238 = scmp.ne.s32.totalorder %s221, %s237
      %p239 = scmp.eq.s32.totalorder %s34, 0
      %p240 = por %p238, %p239
      %s241 = ssub.s32 %s36, %s43
      %p242 = scmp.eq.s32.totalorder %s241, 0
      %s244 = sadd.s32 %s243, 1
      %s245 = scalar_select %p242, %s243, %s244
      %p248 = pneg %p242
      %p249 = scmp.eq.s32.totalorder %s28, 3
      %p250 = por %p248, %p249
      %p251 = scmp.ne.s32.totalorder %s243, %s246
      %p252 = scmp.eq.s32.totalorder %s28, 0
      %p253 = por %p251, %p252
      %p254 = scmp.ne.s32.totalorder %s243, %s246
      %p255 = scmp.eq.s32.totalorder %s33, 3
      %p256 = por %p254, %p255
      %p257 = scmp.ne.s32.totalorder %s246, %s247
      %p258 = scmp.eq.s32.totalorder %s33, 0
      %p259 = por %p257, %p258
      %p260 = scmp.ne.s32.totalorder %s246, %s247
      %p261 = scmp.eq.s32.totalorder %s34, 3
      %p262 = por %p260, %p261
      %p264 = scmp.ne.s32.totalorder %s247, %s263
      %p265 = scmp.eq.s32.totalorder %s34, 0
      %p266 = por %p264, %p265
      %s267 = ssub.s32 %s36, %s43
      %p268 = scmp.eq.s32.totalorder %s267, 0
      %s270 = sadd.s32 %s269, 1
      %s271 = scalar_select %p268, %s269, %s270
      %p274 = pneg %p268
      %p275 = scmp.eq.s32.totalorder %s28, 3
      %p276 = por %p274, %p275
      %p277 = scmp.ne.s32.totalorder %s269, %s272
      %p278 = scmp.eq.s32.totalorder %s28, 0
      %p279 = por %p277, %p278
      %p280 = scmp.ne.s32.totalorder %s269, %s272
      %p281 = scmp.eq.s32.totalorder %s33, 3
      %p282 = por %p280, %p281
      %p283 = scmp.ne.s32.totalorder %s272, %s273
      %p284 = scmp.eq.s32.totalorder %s33, 0
      %p285 = por %p283, %p284
      %p286 = scmp.ne.s32.totalorder %s272, %s273
      %p287 = scmp.eq.s32.totalorder %s34, 3
      %p288 = por %p286, %p287
      %p290 = scmp.ne.s32.totalorder %s273, %s289
      %p291 = scmp.eq.s32.totalorder %s34, 0
      %p292 = por %p290, %p291
      %s293 = ssub.s32 %s36, %s43
      %p294 = scmp.eq.s32.totalorder %s293, 0
      %s296 = sadd.s32 %s295, 1
      %s297 = scalar_select %p294, %s295, %s296
      %p300 = pneg %p294
      %p301 = scmp.eq.s32.totalorder %s28, 3
      %p302 = por %p300, %p301
      %p303 = scmp.ne.s32.totalorder %s295, %s298
      %p304 = scmp.eq.s32.totalorder %s28, 0
      %p305 = por %p303, %p304
      %p306 = scmp.ne.s32.totalorder %s295, %s298
      %p307 = scmp.eq.s32.totalorder %s33, 3
      %p308 = por %p306, %p307
      %p309 = scmp.ne.s32.totalorder %s298, %s299
      %p310 = scmp.eq.s32.totalorder %s33, 0
      %p311 = por %p309, %p310
      %p312 = scmp.ne.s32.totalorder %s298, %s299
      %p313 = scmp.eq.s32.totalorder %s34, 3
      %p314 = por %p312, %p313
      %p316 = scmp.ne.s32.totalorder %s299, %s315
      %p317 = scmp.eq.s32.totalorder %s34, 0
      %p318 = por %p316, %p317
      %s319 = ssub.s32 %s36, %s43
      %p320 = scmp.eq.s32.totalorder %s319, 0
      %s322 = sadd.s32 %s321, 1
      %s323 = scalar_select %p320, %s321, %s322
      %p326 = pneg %p320
      %p327 = scmp.eq.s32.totalorder %s28, 3
      %p328 = por %p326, %p327
      %p329 = scmp.ne.s32.totalorder %s321, %s324
      %p330 = scmp.eq.s32.totalorder %s28, 0
      %p331 = por %p329, %p330
      %p332 = scmp.ne.s32.totalorder %s321, %s324
      %p333 = scmp.eq.s32.totalorder %s33, 3
      %p334 = por %p332, %p333
      %p335 = scmp.ne.s32.totalorder %s324, %s325
      %p336 = scmp.eq.s32.totalorder %s33, 0
      %p337 = por %p335, %p336
      %p338 = scmp.ne.s32.totalorder %s324, %s325
      %p339 = scmp.eq.s32.totalorder %s34, 3
      %p340 = por %p338, %p339
      %p342 = scmp.ne.s32.totalorder %s325, %s341
      %p343 = scmp.eq.s32.totalorder %s34, 0
      %p344 = por %p342, %p343
      %s345 = ssub.s32 %s36, %s43
      %p346 = scmp.eq.s32.totalorder %s345, 0
      %s348 = sadd.s32 %s347, 1
      %s349 = scalar_select %p346, %s347, %s348
      %p352 = pneg %p346
      %p353 = scmp.eq.s32.totalorder %s28, 3
      %p354 = por %p352, %p353
      %p355 = scmp.ne.s32.totalorder %s347, %s350
      %p356 = scmp.eq.s32.totalorder %s28, 0
      %p357 = por %p355, %p356
      %p358 = scmp.ne.s32.totalorder %s347, %s350
      %p359 = scmp.eq.s32.totalorder %s33, 3
      %p360 = por %p358, %p359
      %p361 = scmp.ne.s32.totalorder %s350, %s351
      %p362 = scmp.eq.s32.totalorder %s33, 0
      %p363 = por %p361, %p362
      %p364 = scmp.ne.s32.totalorder %s350, %s351
      %p365 = scmp.eq.s32.totalorder %s34, 3
      %p366 = por %p364, %p365
      %p368 = scmp.ne.s32.totalorder %s351, %s367
      %p369 = scmp.eq.s32.totalorder %s34, 0
      %p370 = por %p368, %p369
      %s371 = ssub.s32 %s36, %s43
      %p372 = scmp.eq.s32.totalorder %s371, 0
      %s374 = sadd.s32 %s373, 1
      %s375 = scalar_select %p372, %s373, %s374
      %p378 = pneg %p372
      %p379 = scmp.eq.s32.totalorder %s28, 3
      %p380 = por %p378, %p379
      %p381 = scmp.ne.s32.totalorder %s373, %s376
      %p382 = scmp.eq.s32.totalorder %s28, 0
      %p383 = por %p381, %p382
      %p384 = scmp.ne.s32.totalorder %s373, %s376
      %p385 = scmp.eq.s32.totalorder %s33, 3
      %p386 = por %p384, %p385
      %p387 = scmp.ne.s32.totalorder %s376, %s377
      %p388 = scmp.eq.s32.totalorder %s33, 0
      %p389 = por %p387, %p388
      %p390 = scmp.ne.s32.totalorder %s376, %s377
      %p391 = scmp.eq.s32.totalorder %s34, 3
      %p392 = por %p390, %p391
      %p394 = scmp.ne.s32.totalorder %s377, %s393
      %p395 = scmp.eq.s32.totalorder %s34, 0
      %p396 = por %p394, %p395
      %s397 = ssub.s32 %s36, %s43
      %p398 = scmp.eq.s32.totalorder %s397, 0
      %s400 = sadd.s32 %s399, 1
      %s401 = scalar_select %p398, %s399, %s400
      %p404 = pneg %p398
      %p405 = scmp.eq.s32.totalorder %s28, 3
      %p406 = por %p404, %p405
      %p407 = scmp.ne.s32.totalorder %s399, %s402
      %p408 = scmp.eq.s32.totalorder %s28, 0
      %p409 = por %p407, %p408
      %p410 = scmp.ne.s32.totalorder %s399, %s402
      %p411 = scmp.eq.s32.totalorder %s33, 3
      %p412 = por %p410, %p411
      %p413 = scmp.ne.s32.totalorder %s402, %s403
      %p414 = scmp.eq.s32.totalorder %s33, 0
      %p415 = por %p413, %p414
      %p416 = scmp.ne.s32.totalorder %s402, %s403
      %p417 = scmp.eq.s32.totalorder %s34, 3
      %p418 = por %p416, %p417
      %p420 = scmp.ne.s32.totalorder %s403, %s419
      %p421 = scmp.eq.s32.totalorder %s34, 0
      %p422 = por %p420, %p421
      %s423 = ssub.s32 %s36, %s43
      %p424 = scmp.eq.s32.totalorder %s423, 0
      %s426 = sadd.s32 %s425, 1
      %s427 = scalar_select %p424, %s425, %s426
      %p430 = pneg %p424
      %p431 = scmp.eq.s32.totalorder %s28, 3
      %p432 = por %p430, %p431
      %p433 = scmp.ne.s32.totalorder %s425, %s428
      %p434 = scmp.eq.s32.totalorder %s28, 0
      %p435 = por %p433, %p434
      %p436 = scmp.ne.s32.totalorder %s425, %s428
      %p437 = scmp.eq.s32.totalorder %s33, 3
      %p438 = por %p436, %p437
      %p439 = scmp.ne.s32.totalorder %s428, %s429
      %p440 = scmp.eq.s32.totalorder %s33, 0
      %p441 = por %p439, %p440
      %p442 = scmp.ne.s32.totalorder %s428, %s429
      %p443 = scmp.eq.s32.totalorder %s34, 3
      %p444 = por %p442, %p443
      %p446 = scmp.ne.s32.totalorder %s429, %s445
      %p447 = scmp.eq.s32.totalorder %s34, 0
      %p448 = por %p446, %p447
      %s450 = sadd.s32 %s449, 1
      %p453 = scmp.eq.s32.totalorder %s28, 3
      %p454 = scmp.ne.s32.totalorder %s449, %s451
      %p455 = scmp.eq.s32.totalorder %s28, 0
      %p456 = por %p454, %p455
      %p457 = scmp.ne.s32.totalorder %s449, %s451
      %p458 = scmp.eq.s32.totalorder %s33, 3
      %p459 = por %p457, %p458
      %p460 = scmp.ne.s32.totalorder %s451, %s452
      %p461 = scmp.eq.s32.totalorder %s33, 0
      %p462 = por %p460, %p461
      %p463 = scmp.ne.s32.totalorder %s451, %s452
      %p464 = scmp.eq.s32.totalorder %s34, 3
      %p465 = por %p463, %p464
      %p467 = scmp.ne.s32.totalorder %s452, %s466
      %p468 = scmp.eq.s32.totalorder %s34, 0
      %p469 = por %p467, %p468
      %s471 = sadd.s32 %s470, 1
      %p474 = scmp.eq.s32.totalorder %s28, 3
      %p475 = scmp.ne.s32.totalorder %s470, %s472
      %p476 = scmp.eq.s32.totalorder %s28, 0
      %p477 = por %p475, %p476
      %p478 = scmp.ne.s32.totalorder %s470, %s472
      %p479 = scmp.eq.s32.totalorder %s33, 3
      %p480 = por %p478, %p479
      %p481 = scmp.ne.s32.totalorder %s472, %s473
      %p482 = scmp.eq.s32.totalorder %s33, 0
      %p483 = por %p481, %p482
      %p484 = scmp.ne.s32.totalorder %s472, %s473
      %p485 = scmp.eq.s32.totalorder %s34, 3
      %p486 = por %p484, %p485
      %p488 = scmp.ne.s32.totalorder %s473, %s487
      %p489 = scmp.eq.s32.totalorder %s34, 0
      %p490 = por %p488, %p489
      %s492 = sadd.s32 %s491, 1
      %p495 = scmp.eq.s32.totalorder %s28, 3
      %p496 = scmp.ne.s32.totalorder %s491, %s493
      %p497 = scmp.eq.s32.totalorder %s28, 0
      %p498 = por %p496, %p497
      %p499 = scmp.ne.s32.totalorder %s491, %s493
      %p500 = scmp.eq.s32.totalorder %s33, 3
      %p501 = por %p499, %p500
      %p502 = scmp.ne.s32.totalorder %s493, %s494
      %p503 = scmp.eq.s32.totalorder %s33, 0
      %p504 = por %p502, %p503
      %p505 = scmp.ne.s32.totalorder %s493, %s494
      %p506 = scmp.eq.s32.totalorder %s34, 3
      %p507 = por %p505, %p506
      %p509 = scmp.ne.s32.totalorder %s494, %s508
      %p510 = scmp.eq.s32.totalorder %s34, 0
      %p511 = por %p509, %p510
      %s512 = ssub.s32 %s35, %s47
      %p513 = scmp.eq.s32.totalorder %s512, 0
      %s515 = sadd.s32 %s514, 1
      %s516 = scalar_select %p513, %s514, %s515
      %p519 = pneg %p513
      %p520 = scmp.eq.s32.totalorder %s28, 3
      %p521 = por %p519, %p520
      %p522 = scmp.ne.s32.totalorder %s514, %s517
      %p523 = scmp.eq.s32.totalorder %s28, 0
      %p524 = por %p522, %p523
      %p525 = scmp.ne.s32.totalorder %s514, %s517
      %p526 = scmp.eq.s32.totalorder %s33, 3
      %p527 = por %p525, %p526
      %p528 = scmp.ne.s32.totalorder %s517, %s518
      %p529 = scmp.eq.s32.totalorder %s33, 0
      %p530 = por %p528, %p529
      %p531 = scmp.ne.s32.totalorder %s517, %s518
      %p532 = scmp.eq.s32.totalorder %s34, 3
      %p533 = por %p531, %p532
      %p535 = scmp.ne.s32.totalorder %s518, %s534
      %p536 = scmp.eq.s32.totalorder %s34, 0
      %p537 = por %p535, %p536
      %p538 = scmp.le.s32.totalorder 1, %s28
      %p539 = scmp.lt.s32.totalorder %s28, 5
      %p540 = pnand %p538, %p539
      %p541 = pneg %p540
      // Predicated region
      $region9: #{tpu_custom_call.1} parent=5 // pred_check
        _
      $region10: #{tpu_custom_call.1} parent=5 // pred_check_branch
        %543 = sbr.rel (%p540) target = $region12
      $region11: #{tpu_custom_call.1} parent=5 // pred_region
        %s544 = ssub.s32 %s28, 1
        // Predicated region
        $region13: #{tpu_custom_call.1} parent=11 // pred_check
          %p545 = pneg %p87
        $region14: #{tpu_custom_call.1} parent=11 // pred_check_branch
          %547 = sbr.rel (%p545) target = $region16
        $region15: #{tpu_custom_call.1} parent=11 // pred_region
          _
        $region16: #{tpu_custom_call.1} parent=11 // pred_fallthru
          _
        // Predicated region
        $region17: #{tpu_custom_call.1} parent=11 // pred_check
          %p548 = pneg %p108
        $region18: #{tpu_custom_call.1} parent=11 // pred_check_branch
          %550 = sbr.rel (%p548) target = $region20
        $region19: #{tpu_custom_call.1} parent=11 // pred_region
          _
        $region20: #{tpu_custom_call.1} parent=11 // pred_fallthru
          _
        // Predicated region
        $region21: #{tpu_custom_call.1} parent=11 // pred_check
          %p551 = pneg %p129
        $region22: #{tpu_custom_call.1} parent=11 // pred_check_branch
          %553 = sbr.rel (%p551) target = $region24
        $region23: #{tpu_custom_call.1} parent=11 // pred_region
          _
        $region24: #{tpu_custom_call.1} parent=11 // pred_fallthru
          _
        // Predicated region
        $region25: #{tpu_custom_call.1} parent=11 // pred_check
          %p554 = pneg %p462
        $region26: #{tpu_custom_call.1} parent=11 // pred_check_branch
          %556 = sbr.rel (%p554) target = $region28
        $region27: #{tpu_custom_call.1} parent=11 // pred_region
          _
        $region28: #{tpu_custom_call.1} parent=11 // pred_fallthru
          _
        // Predicated region
        $region29: #{tpu_custom_call.1} parent=11 // pred_check
          %p557 = pneg %p483
        $region30: #{tpu_custom_call.1} parent=11 // pred_check_branch
          %559 = sbr.rel (%p557) target = $region32
        $region31: #{tpu_custom_call.1} parent=11 // pred_region
          _
        $region32: #{tpu_custom_call.1} parent=11 // pred_fallthru
          _
        // Predicated region
        $region33: #{tpu_custom_call.1} parent=11 // pred_check
          %p560 = pneg %p504
        $region34: #{tpu_custom_call.1} parent=11 // pred_check_branch
          %562 = sbr.rel (%p560) target = $region36
        $region35: #{tpu_custom_call.1} parent=11 // pred_region
          _
        $region36: #{tpu_custom_call.1} parent=11 // pred_fallthru
          _
      $region12: #{tpu_custom_call.1} parent=5 // pred_fallthru
        _
      %p563 = scmp.lt.s32.totalorder %s28, 4
      // Predicated region
      $region37: #{tpu_custom_call.1} parent=5 // pred_check
        %p564 = pneg %p563
      $region38: #{tpu_custom_call.1} parent=5 // pred_check_branch
        %566 = sbr.rel (%p564) target = $region40
      $region39: #{tpu_custom_call.1} parent=5 // pred_region
        // Predicated region
        $region41: #{tpu_custom_call.1} parent=39 // pred_check
          %p567 = pneg %p60
        $region42: #{tpu_custom_call.1} parent=39 // pred_check_branch
          %569 = sbr.rel (%p567) target = $region44
        $region43: #{tpu_custom_call.1} parent=39 // pred_region
          %p570 = scmp.lt.s32.totalorder %s35, 1
          %s571 = scalar_select %p570, %s35, 1
          %s572 = smul.addr %s571, 2
          %s573 = smul.addr %s572, 8
          %s574 = scalar_lea.vmem %s0, %s573
        $region44: #{tpu_custom_call.1} parent=39 // pred_fallthru
          _
        // Predicated region
        $region45: #{tpu_custom_call.1} parent=39 // pred_check
          %p575 = pneg %p149
        $region46: #{tpu_custom_call.1} parent=39 // pred_check_branch
          %577 = sbr.rel (%p575) target = $region48
        $region47: #{tpu_custom_call.1} parent=39 // pred_region
          %p578 = scmp.lt.s32.totalorder %s36, 1
          %s579 = scalar_select %p578, %s36, 1
          %s580 = scalar_lea.vmem %s4, %s579
        $region48: #{tpu_custom_call.1} parent=39 // pred_fallthru
          _
        // Predicated region
        $region49: #{tpu_custom_call.1} parent=39 // pred_check
          %p581 = pneg %p175
        $region50: #{tpu_custom_call.1} parent=39 // pred_check_branch
          %583 = sbr.rel (%p581) target = $region52
        $region51: #{tpu_custom_call.1} parent=39 // pred_region
          %p584 = scmp.lt.s32.totalorder %s36, 1
          %s585 = scalar_select %p584, %s36, 1
          %s586 = scalar_lea.vmem %s5, %s585
        $region52: #{tpu_custom_call.1} parent=39 // pred_fallthru
          _
        // Predicated region
        $region53: #{tpu_custom_call.1} parent=39 // pred_check
          %p587 = pneg %p201
        $region54: #{tpu_custom_call.1} parent=39 // pred_check_branch
          %589 = sbr.rel (%p587) target = $region56
        $region55: #{tpu_custom_call.1} parent=39 // pred_region
          %p590 = scmp.lt.s32.totalorder %s36, 1
          %s591 = scalar_select %p590, %s36, 1
          %s592 = smul.addr %s591, 4
          %s593 = smul.addr %s592, 4
          %s594 = scalar_lea.vmem %s6, %s593
        $region56: #{tpu_custom_call.1} parent=39 // pred_fallthru
          _
        // Predicated region
        $region57: #{tpu_custom_call.1} parent=39 // pred_check
          %p595 = pneg %p227
        $region58: #{tpu_custom_call.1} parent=39 // pred_check_branch
          %597 = sbr.rel (%p595) target = $region60
        $region59: #{tpu_custom_call.1} parent=39 // pred_region
          %p598 = scmp.lt.s32.totalorder %s36, 1
          %s599 = scalar_select %p598, %s36, 1
          %s600 = scalar_lea.vmem %s7, %s599
        $region60: #{tpu_custom_call.1} parent=39 // pred_fallthru
          _
        // Predicated region
        $region61: #{tpu_custom_call.1} parent=39 // pred_check
          %p601 = pneg %p253
        $region62: #{tpu_custom_call.1} parent=39 // pred_check_branch
          %603 = sbr.rel (%p601) target = $region64
        $region63: #{tpu_custom_call.1} parent=39 // pred_region
          %p604 = scmp.lt.s32.totalorder %s36, 1
          %s605 = scalar_select %p604, %s36, 1
          %s606 = smul.addr %s605, 4
          %s607 = smul.addr %s606, 4
          %s608 = scalar_lea.vmem %s8, %s607
        $region64: #{tpu_custom_call.1} parent=39 // pred_fallthru
          _
        // Predicated region
        $region65: #{tpu_custom_call.1} parent=39 // pred_check
          %p609 = pneg %p279
        $region66: #{tpu_custom_call.1} parent=39 // pred_check_branch
          %611 = sbr.rel (%p609) target = $region68
        $region67: #{tpu_custom_call.1} parent=39 // pred_region
          %p612 = scmp.lt.s32.totalorder %s36, 1
          %s613 = scalar_select %p612, %s36, 1
          %s614 = scalar_lea.vmem %s9, %s613
        $region68: #{tpu_custom_call.1} parent=39 // pred_fallthru
          _
        // Predicated region
        $region69: #{tpu_custom_call.1} parent=39 // pred_check
          %p615 = pneg %p305
        $region70: #{tpu_custom_call.1} parent=39 // pred_check_branch
          %617 = sbr.rel (%p615) target = $region72
        $region71: #{tpu_custom_call.1} parent=39 // pred_region
          %p618 = scmp.lt.s32.totalorder %s36, 1
          %s619 = scalar_select %p618, %s36, 1
          %s620 = scalar_lea.vmem %s10, %s619
        $region72: #{tpu_custom_call.1} parent=39 // pred_fallthru
          _
        // Predicated region
        $region73: #{tpu_custom_call.1} parent=39 // pred_check
          %p621 = pneg %p331
        $region74: #{tpu_custom_call.1} parent=39 // pred_check_branch
          %623 = sbr.rel (%p621) target = $region76
        $region75: #{tpu_custom_call.1} parent=39 // pred_region
          %p624 = scmp.lt.s32.totalorder %s36, 1
          %s625 = scalar_select %p624, %s36, 1
          %s626 = scalar_lea.vmem %s11, %s625
        $region76: #{tpu_custom_call.1} parent=39 // pred_fallthru
          _
        // Predicated region
        $region77: #{tpu_custom_call.1} parent=39 // pred_check
          %p627 = pneg %p357
        $region78: #{tpu_custom_call.1} parent=39 // pred_check_branch
          %629 = sbr.rel (%p627) target = $region80
        $region79: #{tpu_custom_call.1} parent=39 // pred_region
          %p630 = scmp.lt.s32.totalorder %s36, 1
          %s631 = scalar_select %p630, %s36, 1
          %s632 = smul.addr %s631, 4
          %s633 = smul.addr %s632, 4
          %s634 = scalar_lea.vmem %s12, %s633
        $region80: #{tpu_custom_call.1} parent=39 // pred_fallthru
          _
        // Predicated region
        $region81: #{tpu_custom_call.1} parent=39 // pred_check
          %p635 = pneg %p383
        $region82: #{tpu_custom_call.1} parent=39 // pred_check_branch
          %637 = sbr.rel (%p635) target = $region84
        $region83: #{tpu_custom_call.1} parent=39 // pred_region
          %p638 = scmp.lt.s32.totalorder %s36, 1
          %s639 = scalar_select %p638, %s36, 1
          %s640 = scalar_lea.vmem %s13, %s639
        $region84: #{tpu_custom_call.1} parent=39 // pred_fallthru
          _
        // Predicated region
        $region85: #{tpu_custom_call.1} parent=39 // pred_check
          %p641 = pneg %p409
        $region86: #{tpu_custom_call.1} parent=39 // pred_check_branch
          %643 = sbr.rel (%p641) target = $region88
        $region87: #{tpu_custom_call.1} parent=39 // pred_region
          %p644 = scmp.lt.s32.totalorder %s36, 1
          %s645 = scalar_select %p644, %s36, 1
          %s646 = smul.addr %s645, 16
          %s647 = smul.addr %s646, 4
          %s648 = scalar_lea.vmem %s14, %s647
        $region88: #{tpu_custom_call.1} parent=39 // pred_fallthru
          _
        // Predicated region
        $region89: #{tpu_custom_call.1} parent=39 // pred_check
          %p649 = pneg %p435
        $region90: #{tpu_custom_call.1} parent=39 // pred_check_branch
          %651 = sbr.rel (%p649) target = $region92
        $region91: #{tpu_custom_call.1} parent=39 // pred_region
          %p652 = scmp.lt.s32.totalorder %s36, 1
          %s653 = scalar_select %p652, %s36, 1
          %s654 = scalar_lea.vmem %s15, %s653
        $region92: #{tpu_custom_call.1} parent=39 // pred_fallthru
          _
      $region40: #{tpu_custom_call.1} parent=5 // pred_fallthru
        _
      %p655 = scmp.le.s32.totalorder 1, %s28
      %p656 = scmp.lt.s32.totalorder %s28, 5
      %p657 = pnand %p655, %p656
      %p658 = pneg %p657
      // Predicated region
      $region93: #{tpu_custom_call.1} parent=5 // pred_check
        _
      $region94: #{tpu_custom_call.1} parent=5 // pred_check_branch
        %660 = sbr.rel (%p657) target = $region96
      $region95: #{tpu_custom_call.1} parent=5 // pred_region
        %s661 = ssub.s32 %s28, 1
        %p662 = scmp.lt.s32.totalorder %s37, 1
        %s663 = scalar_select %p662, %s37, 1
        %s664 = smul.addr %s663, 2
        %s665 = smul.addr %s664, 8
        %s666 = scalar_lea.vmem %s0, %s665
        %p667 = pneg %p66
        %p668 = pneg %p63
        %p669 = pneg %p87
        %p670 = pneg %p84
        %p671 = pneg %p108
        %p672 = pneg %p105
        %p673 = pneg %p129
        %p674 = pneg %p126
        %p675 = scmp.lt.s32.totalorder %s38, 1
        %s676 = scalar_select %p675, %s38, 1
        %s677 = scalar_lea.vmem %s4, %s676
        %p678 = pneg %p155
        %p679 = pneg %p152
        %p680 = scmp.lt.s32.totalorder %s38, 1
        %s681 = scalar_select %p680, %s38, 1
        %s682 = scalar_lea.vmem %s5, %s681
        %p683 = pneg %p181
        %p684 = pneg %p178
        %p685 = scmp.lt.s32.totalorder %s38, 1
        %s686 = scalar_select %p685, %s38, 1
        %s687 = smul.addr %s686, 4
        %s688 = smul.addr %s687, 4
        %s689 = scalar_lea.vmem %s6, %s688
        %p690 = pneg %p207
        %p691 = pneg %p204
        %p692 = scmp.lt.s32.totalorder %s38, 1
        %s693 = scalar_select %p692, %s38, 1
        %s694 = scalar_lea.vmem %s7, %s693
        %p695 = pneg %p233
        %p696 = pneg %p230
        %p697 = scmp.lt.s32.totalorder %s38, 1
        %s698 = scalar_select %p697, %s38, 1
        %s699 = smul.addr %s698, 4
        %s700 = smul.addr %s699, 4
        %s701 = scalar_lea.vmem %s8, %s700
        %p702 = pneg %p259
        %p703 = pneg %p256
        %p704 = scmp.lt.s32.totalorder %s38, 1
        %s705 = scalar_select %p704, %s38, 1
        %s706 = scalar_lea.vmem %s9, %s705
        %p707 = pneg %p285
        %p708 = pneg %p282
        %p709 = scmp.lt.s32.totalorder %s38, 1
        %s710 = scalar_select %p709, %s38, 1
        %s711 = scalar_lea.vmem %s10, %s710
        %p712 = pneg %p311
        %p713 = pneg %p308
        %p714 = scmp.lt.s32.totalorder %s38, 1
        %s715 = scalar_select %p714, %s38, 1
        %s716 = scalar_lea.vmem %s11, %s715
        %p717 = pneg %p337
        %p718 = pneg %p334
        %p719 = scmp.lt.s32.totalorder %s38, 1
        %s720 = scalar_select %p719, %s38, 1
        %s721 = smul.addr %s720, 4
        %s722 = smul.addr %s721, 4
        %s723 = scalar_lea.vmem %s12, %s722
        %p724 = pneg %p363
        %p725 = pneg %p360
        %p726 = scmp.lt.s32.totalorder %s38, 1
        %s727 = scalar_select %p726, %s38, 1
        %s728 = scalar_lea.vmem %s13, %s727
        %p729 = pneg %p389
        %p730 = pneg %p386
        %p731 = scmp.lt.s32.totalorder %s38, 1
        %s732 = scalar_select %p731, %s38, 1
        %s733 = smul.addr %s732, 16
        %s734 = smul.addr %s733, 4
        %s735 = scalar_lea.vmem %s14, %s734
        %p736 = pneg %p415
        %p737 = pneg %p412
        %p738 = scmp.lt.s32.totalorder %s38, 1
        %s739 = scalar_select %p738, %s38, 1
        %s740 = scalar_lea.vmem %s15, %s739
        %p741 = pneg %p441
        %p742 = pneg %p438
        %p743 = pneg %p462
        %p744 = pneg %p459
        %p745 = pneg %p483
        %p746 = pneg %p480
        %p747 = pneg %p504
        %p748 = pneg %p501
        %p749 = pneg %p530
        %p750 = pneg %p527
        %s751 = sand.u32 %s517, 1
        %s752 = scalar_lea.sflag [#allocation4], %s751
        %s753 = sand.u32 %s517, 1
        %s754 = scalar_lea.vmem [#allocation3], %s753
        %p755 = scmp.lt.s32.totalorder %s37, 1
        %s756 = scalar_select %p755, %s37, 1
        %s757 = smul.addr %s756, 2
        %s758 = smul.addr %s757, 8
        %s759 = scalar_lea.vmem %s0, %s758
        %p760 = scmp.lt.s32.totalorder %s38, 1
        %s761 = scalar_select %p760, %s38, 1
        %s762 = scalar_lea.vmem %s4, %s761
        %p763 = scmp.lt.s32.totalorder %s38, 1
        %s764 = scalar_select %p763, %s38, 1
        %s765 = scalar_lea.vmem %s5, %s764
        %p766 = scmp.lt.s32.totalorder %s38, 1
        %s767 = scalar_select %p766, %s38, 1
        %s768 = smul.addr %s767, 4
        %s769 = smul.addr %s768, 4
        %s770 = scalar_lea.vmem %s6, %s769
        %p771 = scmp.lt.s32.totalorder %s38, 1
        %s772 = scalar_select %p771, %s38, 1
        %s773 = scalar_lea.vmem %s7, %s772
        %p774 = scmp.lt.s32.totalorder %s38, 1
        %s775 = scalar_select %p774, %s38, 1
        %s776 = smul.addr %s775, 4
        %s777 = smul.addr %s776, 4
        %s778 = scalar_lea.vmem %s8, %s777
        %p779 = scmp.lt.s32.totalorder %s38, 1
        %s780 = scalar_select %p779, %s38, 1
        %s781 = scalar_lea.vmem %s9, %s780
        %p782 = scmp.lt.s32.totalorder %s38, 1
        %s783 = scalar_select %p782, %s38, 1
        %s784 = scalar_lea.vmem %s10, %s783
        %p785 = scmp.lt.s32.totalorder %s38, 1
        %s786 = scalar_select %p785, %s38, 1
        %s787 = scalar_lea.vmem %s11, %s786
        %p788 = scmp.lt.s32.totalorder %s38, 1
        %s789 = scalar_select %p788, %s38, 1
        %s790 = smul.addr %s789, 4
        %s791 = smul.addr %s790, 4
        %s792 = scalar_lea.vmem %s12, %s791
        %p793 = scmp.lt.s32.totalorder %s38, 1
        %s794 = scalar_select %p793, %s38, 1
        %s795 = scalar_lea.vmem %s13, %s794
        %p796 = scmp.lt.s32.totalorder %s38, 1
        %s797 = scalar_select %p796, %s38, 1
        %s798 = smul.addr %s797, 16
        %s799 = smul.addr %s798, 4
        %s800 = scalar_lea.vmem %s14, %s799
        %p801 = scmp.lt.s32.totalorder %s38, 1
        %s802 = scalar_select %p801, %s38, 1
        %s803 = scalar_lea.vmem %s15, %s802
        %p805 = scmp.eq.s32.totalorder %s38, 0
        // Predicated region
        $region97: #{tpu_custom_call.1} parent=95 // pred_check
          %p806 = pneg %p805
        $region98: #{tpu_custom_call.1} parent=95 // pred_check_branch
          %808 = sbr.rel (%p806) target = $region100
        $region99: #{tpu_custom_call.1} parent=95 // pred_region
          %v809 = vld [vmem:[%s759] sm:$0xff]
          %v810 = vld [vmem:[%s759 + $0x8] sm:$0xff]
          %v811 = vld [vmem:[%s1] sm:$0xff]
          %v812 = vld [vmem:[%s2] sm:$0x1]
          %v814 = vlaneseq
          %v815 = vshrl.u32 %v814, 7
          %v816 = vsub.s32 0, %v815
          %v817 = vrot.slane %v812, %v816
          %vm819 = vcmask 64512
          %v821 = vsel %vm819, %v809, 0
          %v824 = vsel %vm819, %v810, 0
          %826 = vmatprep.subr.mxu0 0.0
          %827 = vmatpush1.msra.mxu0 %v811
          %828 = vmatprep.subr.mxu0 0.0
          %829 = vmatpush1.msra.mxu0 0.0
          %830 = vmatprep.subr.mxu0 0.0
          %831 = vmatpush1.msra.mxu0 0.0
          %832 = vmatprep.subr.mxu0 0.0
          %833 = vmatpush1.msra.mxu0 0.0
          %834 = vmatprep.subr.mxu0 0.0
          %835 = vmatpush1.msra.mxu0 0.0
          %836 = vmatprep.subr.mxu0 0.0
          %837 = vmatpush1.msra.mxu0 0.0
          %838 = vmatprep.subr.mxu0 0.0
          %839 = vmatpush1.msra.mxu0 0.0
          %840 = vmatprep.subr.mxu0 0.0
          %841 = vmatpush1.msra.mxu0 0.0
          %842 = vmatprep.subr.mxu0 0.0
          %843 = vmatpush1.msra.mxu0 0.0
          %844 = vmatprep.subr.mxu0 0.0
          %845 = vmatpush1.msra.mxu0 0.0
          %846 = vmatprep.subr.mxu0 0.0
          %847 = vmatpush1.msra.mxu0 0.0
          %848 = vmatprep.subr.mxu0 0.0
          %849 = vmatpush1.msra.mxu0 0.0
          %850 = vmatprep.subr.mxu0 0.0
          %851 = vmatpush1.msra.mxu0 0.0
          %852 = vmatprep.subr.mxu0 0.0
          %853 = vmatpush1.msra.mxu0 0.0
          %854 = vmatprep.subr.mxu0 0.0
          %855 = vmatpush1.msra.mxu0 0.0
          %856 = vmatprep.subr.mxu0 0.0
          %857 = vmatpush1.msra.mxu0 0.0
          %858 = vmatprep.subr.mxu0 0.0
          %859 = vmatpush1.msra.mxu0 0.0
          %860 = vmatprep.subr.mxu0 0.0
          %861 = vmatpush1.msra.mxu0 0.0
          %862 = vmatprep.subr.mxu0 0.0
          %863 = vmatpush1.msra.mxu0 0.0
          %864 = vmatprep.subr.mxu0 0.0
          %865 = vmatpush1.msra.mxu0 0.0
          %866 = vmatprep.subr.mxu0 0.0
          %867 = vmatpush1.msra.mxu0 0.0
          %868 = vmatprep.subr.mxu0 0.0
          %869 = vmatpush1.msra.mxu0 0.0
          %870 = vmatprep.subr.mxu0 0.0
          %871 = vmatpush1.msra.mxu0 0.0
          %872 = vmatprep.subr.mxu0 0.0
          %873 = vmatpush1.msra.mxu0 0.0
          %874 = vmatprep.subr.mxu0 0.0
          %875 = vmatpush1.msra.mxu0 0.0
          %876 = vmatprep.subr.mxu0 0.0
          %877 = vmatpush1.msra.mxu0 0.0
          %878 = vmatprep.subr.mxu0 0.0
          %879 = vmatpush1.msra.mxu0 0.0
          %880 = vmatprep.subr.mxu0 0.0
          %881 = vmatpush1.msra.mxu0 0.0
          %882 = vmatprep.subr.mxu0 0.0
          %883 = vmatpush1.msra.mxu0 0.0
          %884 = vmatprep.subr.mxu0 0.0
          %885 = vmatpush1.msra.mxu0 0.0
          %886 = vmatprep.subr.mxu0 0.0
          %887 = vmatpush1.msra.mxu0 0.0
          %888 = vmatprep.subr.mxu0 0.0
          %889 = vmatpush1.msra.mxu0 0.0
          %890 = vmatprep.mubr.f32.mxu0 0.0
          %891 = vmatmul.mubr.f32.gmra.mrb[0].mxu0 %v821
          %v892 = vpop.f32.mrb[0].mxu0
          %v893 = vadd.f32 %v817, %v892
          %v894 = vpop.f32.mrb[0].mxu0
          %895 = vmatprep.mubr.f32.mxu0 0.0
          %896 = vmatmul.mubr.f32.gmra.mrb[0].mxu0 %v824
          %v897 = vpop.f32.mrb[0].mxu0
          %v898 = vadd.f32 %v817, %v897
          %v899 = vpop.f32.mrb[0].mxu0
          %900 = vdwg.mxu0
          %v901 = vld [vmem:[%s3] sm:$0xff]
          %v902 = vld [vmem:[%s3 + $0x8] sm:$0xff]
          %v903 = vadd.f32 %v893, %v901
          %v904 = vadd.f32 %v898, %v902
          %vm905 = vcmask 261120
          %906 = vst.msk [vmem:[#allocation2] sm:$0xff] %vm905, %v903
          %907 = vst.msk [vmem:[#allocation2 + $0x8] sm:$0xff] %vm905, %v904
        $region100: #{tpu_custom_call.1} parent=95 // pred_fallthru
          _
        %v908 = vld [vmem:[#allocation2] sm:$0xff]
        %v909 = vld [vmem:[#allocation2 + $0x8] sm:$0xff]
        %v910 = vld [vmem:[%s762] sm:$0x1]
        %v911 = vld [vmem:[%s765] sm:$0x1]
        %vm912 = vcmask 261120
        %v913 = vsel %vm912, %v908, 0.0
        %914 = vadd.xlane.f32.xlu0 %v913
        %v915 = vpop.xlane.xlu0 %914
        %v916 = vsel %vm912, %v909, 0.0
        %917 = vadd.xlane.f32.xlu0 %v916
        %v918 = vpop.xlane.xlu0 %917
        %v919 = vrcp.pop 32.0
        %v920 = vmul.f32 %v915, %v919
        %v921 = vmul.f32 %v918, %v919
        %v922 = vsub.f32 %v908, %v920
        %v923 = vsub.f32 %v909, %v921
        %v924 = vmul.f32 %v922, %v922
        %v925 = vmul.f32 %v923, %v923
        %v926 = vsel %vm912, %v924, 0.0
        %927 = vadd.xlane.f32.xlu0 %v926
        %v928 = vpop.xlane.xlu0 %927
        %v929 = vsel %vm912, %v925, 0.0
        %930 = vadd.xlane.f32.xlu0 %v929
        %v931 = vpop.xlane.xlu0 %930
        %v932 = vmul.f32 %v928, %v919
        %v933 = vmul.f32 %v931, %v919
        %v934 = vadd.f32 %v932, 1e-05
        %v935 = vadd.f32 %v933, 1e-05
        %v936 = vrsqrt.pop %v934
        %v937 = vrsqrt.pop %v935
        %v938 = vmul.f32 %v922, %v936
        %v939 = vmul.f32 %v923, %v937
        %v941 = vlaneseq
        %v942 = vshrl.u32 %v941, 7
        %v943 = vsub.s32 0, %v942
        %v944 = vrot.slane %v910, %v943
        %v946 = vmul.f32 %v938, %v944
        %v947 = vmul.f32 %v939, %v944
        %v949 = vlaneseq
        %v950 = vshrl.u32 %v949, 7
        %v951 = vsub.s32 0, %v950
        %v952 = vrot.slane %v911, %v951
        %v954 = vadd.f32 %v946, %v952
        %v955 = vadd.f32 %v947, %v952
        %v956 = vpack.c.bf16 %v955, %v954
        %v957 = vld [vmem:[%s770] sm:$0xf]
        %v958 = vld [vmem:[%s770 + $0x4] sm:$0xf]
        %v959 = vld [vmem:[%s770 + $0x8] sm:$0xf]
        %v960 = vld [vmem:[%s770 + $0xc] sm:$0xf]
        %v961 = vld [vmem:[%s773] sm:$0x1]
        %v963 = vlaneseq
        %v964 = vshrl.u32 %v963, 7
        %v965 = vsub.s32 0, %v964
        %v966 = vrot.slane %v961, %v965
        %v972 = vunpack.c.l.b16 %v957
        %v973 = vunpack.c.l.b16 %v958
        %v974 = vunpack.c.l.b16 %v959
        %v975 = vunpack.c.l.b16 %v960
        %v976 = vpack.c.b16 %v973, %v972
        %v977 = vpack.c.b16 %v975, %v974
        %v981 = vsel %vm912, %v956, 0
        %983 = vmatprep.subr.bf16.mxu0 0
        %984 = vmatpush1.bf16.msra.mxu0 %v976
        %985 = vmatprep.subr.bf16.mxu0 0
        %986 = vmatpush1.bf16.msra.mxu0 %v977
        %987 = vmatprep.subr.bf16.mxu0 0
        %988 = vmatpush1.bf16.msra.mxu0 0
        %989 = vmatprep.subr.bf16.mxu0 0
        %990 = vmatpush1.bf16.msra.mxu0 0
        %991 = vmatprep.subr.bf16.mxu0 0
        %992 = vmatpush1.bf16.msra.mxu0 0
        %993 = vmatprep.subr.bf16.mxu0 0
        %994 = vmatpush1.bf16.msra.mxu0 0
        %995 = vmatprep.subr.bf16.mxu0 0
        %996 = vmatpush1.bf16.msra.mxu0 0
        %997 = vmatprep.subr.bf16.mxu0 0
        %998 = vmatpush1.bf16.msra.mxu0 0
        %999 = vmatprep.subr.bf16.mxu0 0
        %1000 = vmatpush1.bf16.msra.mxu0 0
        %1001 = vmatprep.subr.bf16.mxu0 0
        %1002 = vmatpush1.bf16.msra.mxu0 0
        %1003 = vmatprep.subr.bf16.mxu0 0
        %1004 = vmatpush1.bf16.msra.mxu0 0
        %1005 = vmatprep.subr.bf16.mxu0 0
        %1006 = vmatpush1.bf16.msra.mxu0 0
        %1007 = vmatprep.subr.bf16.mxu0 0
        %1008 = vmatpush1.bf16.msra.mxu0 0
        %1009 = vmatprep.subr.bf16.mxu0 0
        %1010 = vmatpush1.bf16.msra.mxu0 0
        %1011 = vmatprep.subr.bf16.mxu0 0
        %1012 = vmatpush1.bf16.msra.mxu0 0
        %1013 = vmatprep.subr.bf16.mxu0 0
        %1014 = vmatpush1.bf16.msra.mxu0 0
        %1015 = vmatprep.mubr.bf16.mxu0 0
        %1016 = vmatmul.mubr.bf16.gmra.mrb[0].mxu0 %v981
        %v1017 = vpop.f32.mrb[0].mxu0
        %v1018 = vadd.f32 %v966, %v1017
        %v1019 = vpop.f32.mrb[0].mxu0
        %v1020 = vpop.f32.mrb[0].mxu0
        %v1021 = vadd.f32 %v966, %v1020
        %v1022 = vpop.f32.mrb[0].mxu0
        %1023 = vdwg.mxu0
        %v1024 = vlaneseq
        %v1025 = vshrl.u32 %v1024, 7
        %v1026 = vadd.s32 %v1025, 8
        %v1027 = vlaneseq
        %v1028 = vand.u32 %v1027, 127
        %vm1029 = vcmp.le.s32.totalorder %v1028, %v1025
        %vm1030 = vcmp.le.s32.totalorder %v1028, %v1026
        %v1031 = vpack.c.bf16 %v1021, %v1018
        %1033 = vrot.lane.b32.xlu0 %v1031, 96
        %v1034 = vpop.permute.xlu0 %1033
        %vm1035 = vcmask 64512
        %v1037 = vsel %vm1035, %v1031, 0
        %v1040 = vsel %vm1035, %v1034, 0
        %1042 = vmatprep.subr.bf16.mxu0 0
        %1043 = vmatpush1.bf16.xpose.msra.mxu0 %v1040
        %1044 = vmatprep.subr.bf16.mxu0 0
        %1045 = vmatpush1.bf16.xpose.msra.mxu0 0
        %1046 = vmatprep.subr.bf16.mxu0 0
        %1047 = vmatpush1.bf16.xpose.msra.mxu0 0
        %1048 = vmatprep.subr.bf16.mxu0 0
        %1049 = vmatpush1.bf16.xpose.msra.mxu0 0
        %1050 = vmatprep.subr.bf16.mxu0 0
        %1051 = vmatpush1.bf16.xpose.msra.mxu0 0
        %1052 = vmatprep.subr.bf16.mxu0 0
        %1053 = vmatpush1.bf16.xpose.msra.mxu0 0
        %1054 = vmatprep.subr.bf16.mxu0 0
        %1055 = vmatpush1.bf16.xpose.msra.mxu0 0
        %1056 = vmatprep.subr.bf16.mxu0 0
        %1057 = vmatpush1.bf16.xpose.msra.mxu0 0
        %1058 = vmatprep.subr.bf16.mxu0 0
        %1059 = vmatpush1.bf16.xpose.msra.mxu0 0
        %1060 = vmatprep.subr.bf16.mxu0 0
        %1061 = vmatpush1.bf16.xpose.msra.mxu0 0
        %1062 = vmatprep.subr.bf16.mxu0 0
        %1063 = vmatpush1.bf16.xpose.msra.mxu0 0
        %1064 = vmatprep.subr.bf16.mxu0 0
        %1065 = vmatpush1.bf16.xpose.msra.mxu0 0
        %1066 = vmatprep.subr.bf16.mxu0 0
        %1067 = vmatpush1.bf16.xpose.msra.mxu0 0
        %1068 = vmatprep.subr.bf16.mxu0 0
        %1069 = vmatpush1.bf16.xpose.msra.mxu0 0
        %1070 = vmatprep.subr.bf16.mxu0 0
        %1071 = vmatpush1.bf16.xpose.msra.mxu0 0
        %1072 = vmatprep.subr.bf16.mxu0 0
        %1073 = vmatpush1.bf16.xpose.msra.mxu0 0
        %1074 = vmatprep.mubr.bf16.mxu0 0
        %1075 = vmatmul.mubr.bf16.gmra.mrb[0].mxu0 %v1037
        %v1076 = vpop.f32.mrb[0].mxu0
        %v1077 = vadd.f32 0.0, %v1076
        %v1078 = vpop.f32.mrb[0].mxu0
        %v1079 = vpop.f32.mrb[0].mxu0
        %v1080 = vadd.f32 0.0, %v1079
        %v1081 = vpop.f32.mrb[0].mxu0
        %1082 = vdwg.mxu0
        %v1083 = vmul.f32 %v1077, 0.35355338
        %v1084 = vmul.f32 %v1080, 0.35355338
        %v1085 = vsel %vm1029, %v1083, -1e+30
        %v1086 = vsel %vm1030, %v1084, -1e+30
        %vm1087 = vcmask 130048
        %v1088 = vsel %vm1087, %v1085, -inf
        %1089 = vmax.xlane.f32.xlu0 %v1088
        %v1090 = vpop.xlane.xlu0 %1089
        %v1091 = vsel %vm1087, %v1086, -inf
        %1092 = vmax.xlane.f32.xlu0 %v1091
        %v1093 = vpop.xlane.xlu0 %1092
        %v1094 = vsub.f32 %v1085, %v1090
        %v1095 = vsub.f32 %v1086, %v1093
        %v1096 = vmul.f32 %v1094, 1.442695
        %v1097 = vpow.pop %v1096
        %v1098 = vmul.f32 %v1095, 1.442695
        %v1099 = vpow.pop %v1098
        %v1100 = vsel %vm1087, %v1097, 0.0
        %1101 = vadd.xlane.f32.xlu0 %v1100
        %v1102 = vpop.xlane.xlu0 %1101
        %v1103 = vsel %vm1087, %v1099, 0.0
        %1104 = vadd.xlane.f32.xlu0 %v1103
        %v1105 = vpop.xlane.xlu0 %1104
        %v1106 = vrcp.pop %v1102
        %v1107 = vrcp.pop %v1105
        %v1108 = vmul.f32 %v1097, %v1106
        %v1109 = vmul.f32 %v1099, %v1107
        %v1110 = vpack.c.bf16 %v1109, %v1108
        %1111 = vrot.lane.b32.xlu0 %v1031, 64
        %v1112 = vpop.permute.xlu0 %1111
        %v1115 = vsel %vm1087, %v1110, 0
        %1117 = vmatprep.subr.bf16.mxu0 0
        %1118 = vmatpush1.bf16.msra.mxu0 %v1112
        %1119 = vmatprep.subr.bf16.mxu0 0
        %1120 = vmatpush1.bf16.msra.mxu0 0
        %1121 = vmatprep.subr.bf16.mxu0 0
        %1122 = vmatpush1.bf16.msra.mxu0 0
        %1123 = vmatprep.subr.bf16.mxu0 0
        %1124 = vmatpush1.bf16.msra.mxu0 0
        %1125 = vmatprep.subr.bf16.mxu0 0
        %1126 = vmatpush1.bf16.msra.mxu0 0
        %1127 = vmatprep.subr.bf16.mxu0 0
        %1128 = vmatpush1.bf16.msra.mxu0 0
        %1129 = vmatprep.subr.bf16.mxu0 0
        %1130 = vmatpush1.bf16.msra.mxu0 0
        %1131 = vmatprep.subr.bf16.mxu0 0
        %1132 = vmatpush1.bf16.msra.mxu0 0
        %1133 = vmatprep.subr.bf16.mxu0 0
        %1134 = vmatpush1.bf16.msra.mxu0 0
        %1135 = vmatprep.subr.bf16.mxu0 0
        %1136 = vmatpush1.bf16.msra.mxu0 0
        %1137 = vmatprep.subr.bf16.mxu0 0
        %1138 = vmatpush1.bf16.msra.mxu0 0
        %1139 = vmatprep.subr.bf16.mxu0 0
        %1140 = vmatpush1.bf16.msra.mxu0 0
        %1141 = vmatprep.subr.bf16.mxu0 0
        %1142 = vmatpush1.bf16.msra.mxu0 0
        %1143 = vmatprep.subr.bf16.mxu0 0
        %1144 = vmatpush1.bf16.msra.mxu0 0
        %1145 = vmatprep.subr.bf16.mxu0 0
        %1146 = vmatpush1.bf16.msra.mxu0 0
        %1147 = vmatprep.subr.bf16.mxu0 0
        %1148 = vmatpush1.bf16.msra.mxu0 0
        %1149 = vmatprep.mubr.bf16.mxu0 0
        %1150 = vmatmul.mubr.bf16.gmra.mrb[0].mxu0 %v1115
        %v1151 = vpop.f32.mrb[0].mxu0
        %v1152 = vadd.f32 0.0, %v1151
        %v1153 = vpop.f32.mrb[0].mxu0
        %v1154 = vpop.f32.mrb[0].mxu0
        %v1155 = vadd.f32 0.0, %v1154
        %v1156 = vpop.f32.mrb[0].mxu0
        %1157 = vdwg.mxu0
        %1158 = vrot.lane.b32.xlu0 %v1031, 120
        %v1159 = vpop.permute.xlu0 %1158
        %1160 = vrot.lane.b32.xlu0 %v1031, 88
        %v1161 = vpop.permute.xlu0 %1160
        %v1163 = vsel %vm1035, %v1159, 0
        %v1166 = vsel %vm1035, %v1161, 0
        %1168 = vmatprep.subr.bf16.mxu0 0
        %1169 = vmatpush1.bf16.xpose.msra.mxu0 %v1166
        %1170 = vmatprep.subr.bf16.mxu0 0
        %1171 = vmatpush1.bf16.xpose.msra.mxu0 0
        %1172 = vmatprep.subr.bf16.mxu0 0
        %1173 = vmatpush1.bf16.xpose.msra.mxu0 0
        %1174 = vmatprep.subr.bf16.mxu0 0
        %1175 = vmatpush1.bf16.xpose.msra.mxu0 0
        %1176 = vmatprep.subr.bf16.mxu0 0
        %1177 = vmatpush1.bf16.xpose.msra.mxu0 0
        %1178 = vmatprep.subr.bf16.mxu0 0
        %1179 = vmatpush1.bf16.xpose.msra.mxu0 0
        %1180 = vmatprep.subr.bf16.mxu0 0
        %1181 = vmatpush1.bf16.xpose.msra.mxu0 0
        %1182 = vmatprep.subr.bf16.mxu0 0
        %1183 = vmatpush1.bf16.xpose.msra.mxu0 0
        %1184 = vmatprep.subr.bf16.mxu0 0
        %1185 = vmatpush1.bf16.xpose.msra.mxu0 0
        %1186 = vmatprep.subr.bf16.mxu0 0
        %1187 = vmatpush1.bf16.xpose.msra.mxu0 0
        %1188 = vmatprep.subr.bf16.mxu0 0
        %1189 = vmatpush1.bf16.xpose.msra.mxu0 0
        %1190 = vmatprep.subr.bf16.mxu0 0
        %1191 = vmatpush1.bf16.xpose.msra.mxu0 0
        %1192 = vmatprep.subr.bf16.mxu0 0
        %1193 = vmatpush1.bf16.xpose.msra.mxu0 0
        %1194 = vmatprep.subr.bf16.mxu0 0
        %1195 = vmatpush1.bf16.xpose.msra.mxu0 0
        %1196 = vmatprep.subr.bf16.mxu0 0
        %1197 = vmatpush1.bf16.xpose.msra.mxu0 0
        %1198 = vmatprep.subr.bf16.mxu0 0
        %1199 = vmatpush1.bf16.xpose.msra.mxu0 0
        %1200 = vmatprep.mubr.bf16.mxu0 0
        %1201 = vmatmul.mubr.bf16.gmra.mrb[0].mxu0 %v1163
        %v1202 = vpop.f32.mrb[0].mxu0
        %v1203 = vadd.f32 0.0, %v1202
        %v1204 = vpop.f32.mrb[0].mxu0
        %v1205 = vpop.f32.mrb[0].mxu0
        %v1206 = vadd.f32 0.0, %v1205
        %v1207 = vpop.f32.mrb[0].mxu0
        %1208 = vdwg.mxu0
        %v1209 = vmul.f32 %v1203, 0.35355338
        %v1210 = vmul.f32 %v1206, 0.35355338
        %v1211 = vsel %vm1029, %v1209, -1e+30
        %v1212 = vsel %vm1030, %v1210, -1e+30
        %v1213 = vsel %vm1087, %v1211, -inf
        %1214 = vmax.xlane.f32.xlu0 %v1213
        %v1215 = vpop.xlane.xlu0 %1214
        %v1216 = vsel %vm1087, %v1212, -inf
        %1217 = vmax.xlane.f32.xlu0 %v1216
        %v1218 = vpop.xlane.xlu0 %1217
        %v1219 = vsub.f32 %v1211, %v1215
        %v1220 = vsub.f32 %v1212, %v1218
        %v1221 = vmul.f32 %v1219, 1.442695
        %v1222 = vpow.pop %v1221
        %v1223 = vmul.f32 %v1220, 1.442695
        %v1224 = vpow.pop %v1223
        %v1225 = vsel %vm1087, %v1222, 0.0
        %1226 = vadd.xlane.f32.xlu0 %v1225
        %v1227 = vpop.xlane.xlu0 %1226
        %v1228 = vsel %vm1087, %v1224, 0.0
        %1229 = vadd.xlane.f32.xlu0 %v1228
        %v1230 = vpop.xlane.xlu0 %1229
        %v1231 = vrcp.pop %v1227
        %v1232 = vrcp.pop %v1230
        %v1233 = vmul.f32 %v1222, %v1231
        %v1234 = vmul.f32 %v1224, %v1232
        %v1235 = vpack.c.bf16 %v1234, %v1233
        %1236 = vrot.lane.b32.xlu0 %v1031, 56
        %v1237 = vpop.permute.xlu0 %1236
        %v1240 = vsel %vm1087, %v1235, 0
        %1242 = vmatprep.subr.bf16.mxu0 0
        %1243 = vmatpush1.bf16.msra.mxu0 %v1237
        %1244 = vmatprep.subr.bf16.mxu0 0
        %1245 = vmatpush1.bf16.msra.mxu0 0
        %1246 = vmatprep.subr.bf16.mxu0 0
        %1247 = vmatpush1.bf16.msra.mxu0 0
        %1248 = vmatprep.subr.bf16.mxu0 0
        %1249 = vmatpush1.bf16.msra.mxu0 0
        %1250 = vmatprep.subr.bf16.mxu0 0
        %1251 = vmatpush1.bf16.msra.mxu0 0
        %1252 = vmatprep.subr.bf16.mxu0 0
        %1253 = vmatpush1.bf16.msra.mxu0 0
        %1254 = vmatprep.subr.bf16.mxu0 0
        %1255 = vmatpush1.bf16.msra.mxu0 0
        %1256 = vmatprep.subr.bf16.mxu0 0
        %1257 = vmatpush1.bf16.msra.mxu0 0
        %1258 = vmatprep.subr.bf16.mxu0 0
        %1259 = vmatpush1.bf16.msra.mxu0 0
        %1260 = vmatprep.subr.bf16.mxu0 0
        %1261 = vmatpush1.bf16.msra.mxu0 0
        %1262 = vmatprep.subr.bf16.mxu0 0
        %1263 = vmatpush1.bf16.msra.mxu0 0
        %1264 = vmatprep.subr.bf16.mxu0 0
        %1265 = vmatpush1.bf16.msra.mxu0 0
        %1266 = vmatprep.subr.bf16.mxu0 0
        %1267 = vmatpush1.bf16.msra.mxu0 0
        %1268 = vmatprep.subr.bf16.mxu0 0
        %1269 = vmatpush1.bf16.msra.mxu0 0
        %1270 = vmatprep.subr.bf16.mxu0 0
        %1271 = vmatpush1.bf16.msra.mxu0 0
        %1272 = vmatprep.subr.bf16.mxu0 0
        %1273 = vmatpush1.bf16.msra.mxu0 0
        %1274 = vmatprep.mubr.bf16.mxu0 0
        %1275 = vmatmul.mubr.bf16.gmra.mrb[0].mxu0 %v1240
        %v1276 = vpop.f32.mrb[0].mxu0
        %v1277 = vadd.f32 0.0, %v1276
        %v1278 = vpop.f32.mrb[0].mxu0
        %v1279 = vpop.f32.mrb[0].mxu0
        %v1280 = vadd.f32 0.0, %v1279
        %v1281 = vpop.f32.mrb[0].mxu0
        %1282 = vdwg.mxu0
        %1283 = vrot.lane.b32.xlu0 %v1031, 112
        %v1284 = vpop.permute.xlu0 %1283
        %1285 = vrot.lane.b32.xlu0 %v1031, 80
        %v1286 = vpop.permute.xlu0 %1285
        %v1288 = vsel %vm1035, %v1284, 0
        %v1291 = vsel %vm1035, %v1286, 0
        %1293 = vmatprep.subr.bf16.mxu0 0
        %1294 = vmatpush1.bf16.xpose.msra.mxu0 %v1291
        %1295 = vmatprep.subr.bf16.mxu0 0
        %1296 = vmatpush1.bf16.xpose.msra.mxu0 0
        %1297 = vmatprep.subr.bf16.mxu0 0
        %1298 = vmatpush1.bf16.xpose.msra.mxu0 0
        %1299 = vmatprep.subr.bf16.mxu0 0
        %1300 = vmatpush1.bf16.xpose.msra.mxu0 0
        %1301 = vmatprep.subr.bf16.mxu0 0
        %1302 = vmatpush1.bf16.xpose.msra.mxu0 0
        %1303 = vmatprep.subr.bf16.mxu0 0
        %1304 = vmatpush1.bf16.xpose.msra.mxu0 0
        %1305 = vmatprep.subr.bf16.mxu0 0
        %1306 = vmatpush1.bf16.xpose.msra.mxu0 0
        %1307 = vmatprep.subr.bf16.mxu0 0
        %1308 = vmatpush1.bf16.xpose.msra.mxu0 0
        %1309 = vmatprep.subr.bf16.mxu0 0
        %1310 = vmatpush1.bf16.xpose.msra.mxu0 0
        %1311 = vmatprep.subr.bf16.mxu0 0
        %1312 = vmatpush1.bf16.xpose.msra.mxu0 0
        %1313 = vmatprep.subr.bf16.mxu0 0
        %1314 = vmatpush1.bf16.xpose.msra.mxu0 0
        %1315 = vmatprep.subr.bf16.mxu0 0
        %1316 = vmatpush1.bf16.xpose.msra.mxu0 0
        %1317 = vmatprep.subr.bf16.mxu0 0
        %1318 = vmatpush1.bf16.xpose.msra.mxu0 0
        %1319 = vmatprep.subr.bf16.mxu0 0
        %1320 = vmatpush1.bf16.xpose.msra.mxu0 0
        %1321 = vmatprep.subr.bf16.mxu0 0
        %1322 = vmatpush1.bf16.xpose.msra.mxu0 0
        %1323 = vmatprep.subr.bf16.mxu0 0
        %1324 = vmatpush1.bf16.xpose.msra.mxu0 0
        %1325 = vmatprep.mubr.bf16.mxu0 0
        %1326 = vmatmul.mubr.bf16.gmra.mrb[0].mxu0 %v1288
        %v1327 = vpop.f32.mrb[0].mxu0
        %v1328 = vadd.f32 0.0, %v1327
        %v1329 = vpop.f32.mrb[0].mxu0
        %v1330 = vpop.f32.mrb[0].mxu0
        %v1331 = vadd.f32 0.0, %v1330
        %v1332 = vpop.f32.mrb[0].mxu0
        %1333 = vdwg.mxu0
        %v1334 = vmul.f32 %v1328, 0.35355338
        %v1335 = vmul.f32 %v1331, 0.35355338
        %v1336 = vsel %vm1029, %v1334, -1e+30
        %v1337 = vsel %vm1030, %v1335, -1e+30
        %v1338 = vsel %vm1087, %v1336, -inf
        %1339 = vmax.xlane.f32.xlu0 %v1338
        %v1340 = vpop.xlane.xlu0 %1339
        %v1341 = vsel %vm1087, %v1337, -inf
        %1342 = vmax.xlane.f32.xlu0 %v1341
        %v1343 = vpop.xlane.xlu0 %1342
        %v1344 = vsub.f32 %v1336, %v1340
        %v1345 = vsub.f32 %v1337, %v1343
        %v1346 = vmul.f32 %v1344, 1.442695
        %v1347 = vpow.pop %v1346
        %v1348 = vmul.f32 %v1345, 1.442695
        %v1349 = vpow.pop %v1348
        %v1350 = vsel %vm1087, %v1347, 0.0
        %1351 = vadd.xlane.f32.xlu0 %v1350
        %v1352 = vpop.xlane.xlu0 %1351
        %v1353 = vsel %vm1087, %v1349, 0.0
        %1354 = vadd.xlane.f32.xlu0 %v1353
        %v1355 = vpop.xlane.xlu0 %1354
        %v1356 = vrcp.pop %v1352
        %v1357 = vrcp.pop %v1355
        %v1358 = vmul.f32 %v1347, %v1356
        %v1359 = vmul.f32 %v1349, %v1357
        %v1360 = vpack.c.bf16 %v1359, %v1358
        %1361 = vrot.lane.b32.xlu0 %v1031, 48
        %v1362 = vpop.permute.xlu0 %1361
        %v1365 = vsel %vm1087, %v1360, 0
        %1367 = vmatprep.subr.bf16.mxu0 0
        %1368 = vmatpush1.bf16.msra.mxu0 %v1362
        %1369 = vmatprep.subr.bf16.mxu0 0
        %1370 = vmatpush1.bf16.msra.mxu0 0
        %1371 = vmatprep.subr.bf16.mxu0 0
        %1372 = vmatpush1.bf16.msra.mxu0 0
        %1373 = vmatprep.subr.bf16.mxu0 0
        %1374 = vmatpush1.bf16.msra.mxu0 0
        %1375 = vmatprep.subr.bf16.mxu0 0
        %1376 = vmatpush1.bf16.msra.mxu0 0
        %1377 = vmatprep.subr.bf16.mxu0 0
        %1378 = vmatpush1.bf16.msra.mxu0 0
        %1379 = vmatprep.subr.bf16.mxu0 0
        %1380 = vmatpush1.bf16.msra.mxu0 0
        %1381 = vmatprep.subr.bf16.mxu0 0
        %1382 = vmatpush1.bf16.msra.mxu0 0
        %1383 = vmatprep.subr.bf16.mxu0 0
        %1384 = vmatpush1.bf16.msra.mxu0 0
        %1385 = vmatprep.subr.bf16.mxu0 0
        %1386 = vmatpush1.bf16.msra.mxu0 0
        %1387 = vmatprep.subr.bf16.mxu0 0
        %1388 = vmatpush1.bf16.msra.mxu0 0
        %1389 = vmatprep.subr.bf16.mxu0 0
        %1390 = vmatpush1.bf16.msra.mxu0 0
        %1391 = vmatprep.subr.bf16.mxu0 0
        %1392 = vmatpush1.bf16.msra.mxu0 0
        %1393 = vmatprep.subr.bf16.mxu0 0
        %1394 = vmatpush1.bf16.msra.mxu0 0
        %1395 = vmatprep.subr.bf16.mxu0 0
        %1396 = vmatpush1.bf16.msra.mxu0 0
        %1397 = vmatprep.subr.bf16.mxu0 0
        %1398 = vmatpush1.bf16.msra.mxu0 0
        %1399 = vmatprep.mubr.bf16.mxu0 0
        %1400 = vmatmul.mubr.bf16.gmra.mrb[0].mxu0 %v1365
        %v1401 = vpop.f32.mrb[0].mxu0
        %v1402 = vadd.f32 0.0, %v1401
        %v1403 = vpop.f32.mrb[0].mxu0
        %v1404 = vpop.f32.mrb[0].mxu0
        %v1405 = vadd.f32 0.0, %v1404
        %v1406 = vpop.f32.mrb[0].mxu0
        %1407 = vdwg.mxu0
        %1408 = vrot.lane.b32.xlu0 %v1031, 104
        %v1409 = vpop.permute.xlu0 %1408
        %1410 = vrot.lane.b32.xlu0 %v1031, 72
        %v1411 = vpop.permute.xlu0 %1410
        %v1413 = vsel %vm1035, %v1409, 0
        %v1416 = vsel %vm1035, %v1411, 0
        %1418 = vmatprep.subr.bf16.mxu0 0
        %1419 = vmatpush1.bf16.xpose.msra.mxu0 %v1416
        %1420 = vmatprep.subr.bf16.mxu0 0
        %1421 = vmatpush1.bf16.xpose.msra.mxu0 0
        %1422 = vmatprep.subr.bf16.mxu0 0
        %1423 = vmatpush1.bf16.xpose.msra.mxu0 0
        %1424 = vmatprep.subr.bf16.mxu0 0
        %1425 = vmatpush1.bf16.xpose.msra.mxu0 0
        %1426 = vmatprep.subr.bf16.mxu0 0
        %1427 = vmatpush1.bf16.xpose.msra.mxu0 0
        %1428 = vmatprep.subr.bf16.mxu0 0
        %1429 = vmatpush1.bf16.xpose.msra.mxu0 0
        %1430 = vmatprep.subr.bf16.mxu0 0
        %1431 = vmatpush1.bf16.xpose.msra.mxu0 0
        %1432 = vmatprep.subr.bf16.mxu0 0
        %1433 = vmatpush1.bf16.xpose.msra.mxu0 0
        %1434 = vmatprep.subr.bf16.mxu0 0
        %1435 = vmatpush1.bf16.xpose.msra.mxu0 0
        %1436 = vmatprep.subr.bf16.mxu0 0
        %1437 = vmatpush1.bf16.xpose.msra.mxu0 0
        %1438 = vmatprep.subr.bf16.mxu0 0
        %1439 = vmatpush1.bf16.xpose.msra.mxu0 0
        %1440 = vmatprep.subr.bf16.mxu0 0
        %1441 = vmatpush1.bf16.xpose.msra.mxu0 0
        %1442 = vmatprep.subr.bf16.mxu0 0
        %1443 = vmatpush1.bf16.xpose.msra.mxu0 0
        %1444 = vmatprep.subr.bf16.mxu0 0
        %1445 = vmatpush1.bf16.xpose.msra.mxu0 0
        %1446 = vmatprep.subr.bf16.mxu0 0
        %1447 = vmatpush1.bf16.xpose.msra.mxu0 0
        %1448 = vmatprep.subr.bf16.mxu0 0
        %1449 = vmatpush1.bf16.xpose.msra.mxu0 0
        %1450 = vmatprep.mubr.bf16.mxu0 0
        %1451 = vmatmul.mubr.bf16.gmra.mrb[0].mxu0 %v1413
        %v1452 = vpop.f32.mrb[0].mxu0
        %v1453 = vadd.f32 0.0, %v1452
        %v1454 = vpop.f32.mrb[0].mxu0
        %v1455 = vpop.f32.mrb[0].mxu0
        %v1456 = vadd.f32 0.0, %v1455
        %v1457 = vpop.f32.mrb[0].mxu0
        %1458 = vdwg.mxu0
        %v1459 = vmul.f32 %v1453, 0.35355338
        %v1460 = vmul.f32 %v1456, 0.35355338
        %v1461 = vsel %vm1029, %v1459, -1e+30
        %v1462 = vsel %vm1030, %v1460, -1e+30
        %v1463 = vsel %vm1087, %v1461, -inf
        %1464 = vmax.xlane.f32.xlu0 %v1463
        %v1465 = vpop.xlane.xlu0 %1464
        %v1466 = vsel %vm1087, %v1462, -inf
        %1467 = vmax.xlane.f32.xlu0 %v1466
        %v1468 = vpop.xlane.xlu0 %1467
        %v1469 = vsub.f32 %v1461, %v1465
        %v1470 = vsub.f32 %v1462, %v1468
        %v1471 = vmul.f32 %v1469, 1.442695
        %v1472 = vpow.pop %v1471
        %v1473 = vmul.f32 %v1470, 1.442695
        %v1474 = vpow.pop %v1473
        %v1475 = vsel %vm1087, %v1472, 0.0
        %1476 = vadd.xlane.f32.xlu0 %v1475
        %v1477 = vpop.xlane.xlu0 %1476
        %v1478 = vsel %vm1087, %v1474, 0.0
        %1479 = vadd.xlane.f32.xlu0 %v1478
        %v1480 = vpop.xlane.xlu0 %1479
        %v1481 = vrcp.pop %v1477
        %v1482 = vrcp.pop %v1480
        %v1483 = vmul.f32 %v1472, %v1481
        %v1484 = vmul.f32 %v1474, %v1482
        %v1485 = vpack.c.bf16 %v1484, %v1483
        %1486 = vrot.lane.b32.xlu0 %v1031, 40
        %v1487 = vpop.permute.xlu0 %1486
        %v1490 = vsel %vm1087, %v1485, 0
        %1492 = vmatprep.subr.bf16.mxu0 0
        %1493 = vmatpush1.bf16.msra.mxu0 %v1487
        %1494 = vmatprep.subr.bf16.mxu0 0
        %1495 = vmatpush1.bf16.msra.mxu0 0
        %1496 = vmatprep.subr.bf16.mxu0 0
        %1497 = vmatpush1.bf16.msra.mxu0 0
        %1498 = vmatprep.subr.bf16.mxu0 0
        %1499 = vmatpush1.bf16.msra.mxu0 0
        %1500 = vmatprep.subr.bf16.mxu0 0
        %1501 = vmatpush1.bf16.msra.mxu0 0
        %1502 = vmatprep.subr.bf16.mxu0 0
        %1503 = vmatpush1.bf16.msra.mxu0 0
        %1504 = vmatprep.subr.bf16.mxu0 0
        %1505 = vmatpush1.bf16.msra.mxu0 0
        %1506 = vmatprep.subr.bf16.mxu0 0
        %1507 = vmatpush1.bf16.msra.mxu0 0
        %1508 = vmatprep.subr.bf16.mxu0 0
        %1509 = vmatpush1.bf16.msra.mxu0 0
        %1510 = vmatprep.subr.bf16.mxu0 0
        %1511 = vmatpush1.bf16.msra.mxu0 0
        %1512 = vmatprep.subr.bf16.mxu0 0
        %1513 = vmatpush1.bf16.msra.mxu0 0
        %1514 = vmatprep.subr.bf16.mxu0 0
        %1515 = vmatpush1.bf16.msra.mxu0 0
        %1516 = vmatprep.subr.bf16.mxu0 0
        %1517 = vmatpush1.bf16.msra.mxu0 0
        %1518 = vmatprep.subr.bf16.mxu0 0
        %1519 = vmatpush1.bf16.msra.mxu0 0
        %1520 = vmatprep.subr.bf16.mxu0 0
        %1521 = vmatpush1.bf16.msra.mxu0 0
        %1522 = vmatprep.subr.bf16.mxu0 0
        %1523 = vmatpush1.bf16.msra.mxu0 0
        %1524 = vmatprep.mubr.bf16.mxu0 0
        %1525 = vmatmul.mubr.bf16.gmra.mrb[0].mxu0 %v1490
        %v1526 = vpop.f32.mrb[0].mxu0
        %v1527 = vadd.f32 0.0, %v1526
        %v1528 = vpop.f32.mrb[0].mxu0
        %v1529 = vpop.f32.mrb[0].mxu0
        %v1530 = vadd.f32 0.0, %v1529
        %v1531 = vpop.f32.mrb[0].mxu0
        %1532 = vdwg.mxu0
        %1535 = vrot.lane.b32.xlu0 %v1277, 8
        %v1536 = vpop.permute.xlu0 %1535
        %1537 = vrot.lane.b32.xlu0 %v1280, 8
        %v1538 = vpop.permute.xlu0 %1537
        %1543 = vrot.lane.b32.xlu0 %v1402, 16
        %v1544 = vpop.permute.xlu0 %1543
        %1545 = vrot.lane.b32.xlu0 %v1405, 16
        %v1546 = vpop.permute.xlu0 %1545
        %1551 = vrot.lane.b32.xlu0 %v1527, 24
        %v1552 = vpop.permute.xlu0 %1551
        %1553 = vrot.lane.b32.xlu0 %v1530, 24
        %v1554 = vpop.permute.xlu0 %1553
        %v1557 = vsel %vm1035, %v1152, %v1536
        %v1558 = vsel %vm1035, %v1155, %v1538
        %v1559 = vsel %vm1087, %v1557, %v1544
        %v1560 = vsel %vm1087, %v1558, %v1546
        %vm1561 = vcmask 195584
        %v1562 = vsel %vm1561, %v1559, %v1552
        %v1563 = vsel %vm1561, %v1560, %v1554
        %v1564 = vpack.c.bf16 %v1563, %v1562
        %v1565 = vld [vmem:[%s778] sm:$0xf]
        %v1566 = vld [vmem:[%s778 + $0x4] sm:$0xf]
        %v1567 = vld [vmem:[%s778 + $0x8] sm:$0xf]
        %v1568 = vld [vmem:[%s778 + $0xc] sm:$0xf]
        %v1569 = vld [vmem:[%s781] sm:$0x1]
        %v1571 = vlaneseq
        %v1572 = vshrl.u32 %v1571, 7
        %v1573 = vsub.s32 0, %v1572
        %v1574 = vrot.slane %v1569, %v1573
        %v1580 = vunpack.c.l.b16 %v1565
        %v1581 = vunpack.c.l.b16 %v1566
        %v1582 = vunpack.c.l.b16 %v1567
        %v1583 = vunpack.c.l.b16 %v1568
        %v1584 = vpack.c.b16 %v1581, %v1580
        %v1585 = vpack.c.b16 %v1583, %v1582
        %v1589 = vsel %vm912, %v1564, 0
        %1591 = vmatprep.subr.bf16.mxu0 0
        %1592 = vmatpush1.bf16.msra.mxu0 %v1584
        %1593 = vmatprep.subr.bf16.mxu0 0
        %1594 = vmatpush1.bf16.msra.mxu0 %v1585
        %1595 = vmatprep.subr.bf16.mxu0 0
        %1596 = vmatpush1.bf16.msra.mxu0 0
        %1597 = vmatprep.subr.bf16.mxu0 0
        %1598 = vmatpush1.bf16.msra.mxu0 0
        %1599 = vmatprep.subr.bf16.mxu0 0
        %1600 = vmatpush1.bf16.msra.mxu0 0
        %1601 = vmatprep.subr.bf16.mxu0 0
        %1602 = vmatpush1.bf16.msra.mxu0 0
        %1603 = vmatprep.subr.bf16.mxu0 0
        %1604 = vmatpush1.bf16.msra.mxu0 0
        %1605 = vmatprep.subr.bf16.mxu0 0
        %1606 = vmatpush1.bf16.msra.mxu0 0
        %1607 = vmatprep.subr.bf16.mxu0 0
        %1608 = vmatpush1.bf16.msra.mxu0 0
        %1609 = vmatprep.subr.bf16.mxu0 0
        %1610 = vmatpush1.bf16.msra.mxu0 0
        %1611 = vmatprep.subr.bf16.mxu0 0
        %1612 = vmatpush1.bf16.msra.mxu0 0
        %1613 = vmatprep.subr.bf16.mxu0 0
        %1614 = vmatpush1.bf16.msra.mxu0 0
        %1615 = vmatprep.subr.bf16.mxu0 0
        %1616 = vmatpush1.bf16.msra.mxu0 0
        %1617 = vmatprep.subr.bf16.mxu0 0
        %1618 = vmatpush1.bf16.msra.mxu0 0
        %1619 = vmatprep.subr.bf16.mxu0 0
        %1620 = vmatpush1.bf16.msra.mxu0 0
        %1621 = vmatprep.subr.bf16.mxu0 0
        %1622 = vmatpush1.bf16.msra.mxu0 0
        %1623 = vmatprep.mubr.bf16.mxu0 0
        %1624 = vmatmul.mubr.bf16.gmra.mrb[0].mxu0 %v1589
        %v1625 = vpop.f32.mrb[0].mxu0
        %v1626 = vadd.f32 %v1574, %v1625
        %v1627 = vpop.f32.mrb[0].mxu0
        %v1628 = vpop.f32.mrb[0].mxu0
        %v1629 = vadd.f32 %v1574, %v1628
        %v1630 = vpop.f32.mrb[0].mxu0
        %1631 = vdwg.mxu0
        %v1632 = vadd.f32 %v908, %v1626
        %v1633 = vadd.f32 %v909, %v1629
        %v1634 = vld [vmem:[%s784] sm:$0x1]
        %v1635 = vld [vmem:[%s787] sm:$0x1]
        %v1636 = vsel %vm912, %v1632, 0.0
        %1637 = vadd.xlane.f32.xlu0 %v1636
        %v1638 = vpop.xlane.xlu0 %1637
        %v1639 = vsel %vm912, %v1633, 0.0
        %1640 = vadd.xlane.f32.xlu0 %v1639
        %v1641 = vpop.xlane.xlu0 %1640
        %v1642 = vmul.f32 %v1638, %v919
        %v1643 = vmul.f32 %v1641, %v919
        %v1644 = vsub.f32 %v1632, %v1642
        %v1645 = vsub.f32 %v1633, %v1643
        %v1646 = vmul.f32 %v1644, %v1644
        %v1647 = vmul.f32 %v1645, %v1645
        %v1648 = vsel %vm912, %v1646, 0.0
        %1649 = vadd.xlane.f32.xlu0 %v1648
        %v1650 = vpop.xlane.xlu0 %1649
        %v1651 = vsel %vm912, %v1647, 0.0
        %1652 = vadd.xlane.f32.xlu0 %v1651
        %v1653 = vpop.xlane.xlu0 %1652
        %v1654 = vmul.f32 %v1650, %v919
        %v1655 = vmul.f32 %v1653, %v919
        %v1656 = vadd.f32 %v1654, 1e-05
        %v1657 = vadd.f32 %v1655, 1e-05
        %v1658 = vrsqrt.pop %v1656
        %v1659 = vrsqrt.pop %v1657
        %v1660 = vmul.f32 %v1644, %v1658
        %v1661 = vmul.f32 %v1645, %v1659
        %v1663 = vlaneseq
        %v1664 = vshrl.u32 %v1663, 7
        %v1665 = vsub.s32 0, %v1664
        %v1666 = vrot.slane %v1634, %v1665
        %v1668 = vmul.f32 %v1660, %v1666
        %v1669 = vmul.f32 %v1661, %v1666
        %v1671 = vlaneseq
        %v1672 = vshrl.u32 %v1671, 7
        %v1673 = vsub.s32 0, %v1672
        %v1674 = vrot.slane %v1635, %v1673
        %v1676 = vadd.f32 %v1668, %v1674
        %v1677 = vadd.f32 %v1669, %v1674
        %v1678 = vpack.c.bf16 %v1677, %v1676
        %v1679 = vld [vmem:[%s792] sm:$0xf]
        %v1680 = vld [vmem:[%s792 + $0x4] sm:$0xf]
        %v1681 = vld [vmem:[%s792 + $0x8] sm:$0xf]
        %v1682 = vld [vmem:[%s792 + $0xc] sm:$0xf]
        %v1683 = vld [vmem:[%s795] sm:$0x1]
        %v1685 = vlaneseq
        %v1686 = vshrl.u32 %v1685, 7
        %v1687 = vsub.s32 0, %v1686
        %v1688 = vrot.slane %v1683, %v1687
        %v1694 = vunpack.c.l.b16 %v1679
        %v1695 = vunpack.c.l.b16 %v1680
        %v1696 = vunpack.c.l.b16 %v1681
        %v1697 = vunpack.c.l.b16 %v1682
        %v1698 = vpack.c.b16 %v1695, %v1694
        %v1699 = vpack.c.b16 %v1697, %v1696
        %v1703 = vsel %vm912, %v1678, 0
        %1705 = vmatprep.subr.bf16.mxu0 0
        %1706 = vmatpush1.bf16.msra.mxu0 %v1698
        %1707 = vmatprep.subr.bf16.mxu0 0
        %1708 = vmatpush1.bf16.msra.mxu0 %v1699
        %1709 = vmatprep.subr.bf16.mxu0 0
        %1710 = vmatpush1.bf16.msra.mxu0 0
        %1711 = vmatprep.subr.bf16.mxu0 0
        %1712 = vmatpush1.bf16.msra.mxu0 0
        %1713 = vmatprep.subr.bf16.mxu0 0
        %1714 = vmatpush1.bf16.msra.mxu0 0
        %1715 = vmatprep.subr.bf16.mxu0 0
        %1716 = vmatpush1.bf16.msra.mxu0 0
        %1717 = vmatprep.subr.bf16.mxu0 0
        %1718 = vmatpush1.bf16.msra.mxu0 0
        %1719 = vmatprep.subr.bf16.mxu0 0
        %1720 = vmatpush1.bf16.msra.mxu0 0
        %1721 = vmatprep.subr.bf16.mxu0 0
        %1722 = vmatpush1.bf16.msra.mxu0 0
        %1723 = vmatprep.subr.bf16.mxu0 0
        %1724 = vmatpush1.bf16.msra.mxu0 0
        %1725 = vmatprep.subr.bf16.mxu0 0
        %1726 = vmatpush1.bf16.msra.mxu0 0
        %1727 = vmatprep.subr.bf16.mxu0 0
        %1728 = vmatpush1.bf16.msra.mxu0 0
        %1729 = vmatprep.subr.bf16.mxu0 0
        %1730 = vmatpush1.bf16.msra.mxu0 0
        %1731 = vmatprep.subr.bf16.mxu0 0
        %1732 = vmatpush1.bf16.msra.mxu0 0
        %1733 = vmatprep.subr.bf16.mxu0 0
        %1734 = vmatpush1.bf16.msra.mxu0 0
        %1735 = vmatprep.subr.bf16.mxu0 0
        %1736 = vmatpush1.bf16.msra.mxu0 0
        %1737 = vmatprep.mubr.bf16.mxu0 0
        %1738 = vmatmul.mubr.bf16.gmra.mrb[0].mxu0 %v1703
        %v1739 = vpop.f32.mrb[0].mxu0
        %v1740 = vadd.f32 %v1688, %v1739
        %v1741 = vpop.f32.mrb[0].mxu0
        %v1742 = vpop.f32.mrb[0].mxu0
        %v1743 = vadd.f32 %v1688, %v1742
        %v1744 = vpop.f32.mrb[0].mxu0
        %1745 = vdwg.mxu0
        %v1746 = vmul.f32 %v1740, 0.5
        %v1747 = vmul.f32 %v1743, 0.5
        %v1748 = vmul.f32 %v1740, %v1740
        %v1749 = vmul.f32 %v1743, %v1743
        %v1750 = vmul.f32 %v1740, %v1748
        %v1751 = vmul.f32 %v1743, %v1749
        %v1752 = vmul.f32 %v1750, 0.044715
        %v1753 = vmul.f32 %v1751, 0.044715
        %v1754 = vadd.f32 %v1740, %v1752
        %v1755 = vadd.f32 %v1743, %v1753
        %v1756 = vmul.f32 %v1754, 0.7978846
        %v1757 = vmul.f32 %v1755, 0.7978846
        %v1758 = vtanh.pop %v1756
        %v1759 = vtanh.pop %v1757
        %v1760 = vadd.f32 %v1758, 1.0
        %v1761 = vadd.f32 %v1759, 1.0
        %v1762 = vmul.f32 %v1746, %v1760
        %v1763 = vmul.f32 %v1747, %v1761
        %v1764 = vpack.c.bf16 %v1763, %v1762
        %v1765 = vld [vmem:[%s800] sm:$0xf]
        %v1766 = vld [vmem:[%s800 + $0x4] sm:$0xf]
        %v1767 = vld [vmem:[%s800 + $0x8] sm:$0xf]
        %v1768 = vld [vmem:[%s800 + $0xc] sm:$0xf]
        %v1769 = vld [vmem:[%s800 + $0x10] sm:$0xf]
        %v1770 = vld [vmem:[%s800 + $0x14] sm:$0xf]
        %v1771 = vld [vmem:[%s800 + $0x18] sm:$0xf]
        %v1772 = vld [vmem:[%s800 + $0x1c] sm:$0xf]
        %v1773 = vld [vmem:[%s800 + $0x20] sm:$0xf]
        %v1774 = vld [vmem:[%s800 + $0x24] sm:$0xf]
        %v1775 = vld [vmem:[%s800 + $0x28] sm:$0xf]
        %v1776 = vld [vmem:[%s800 + $0x2c] sm:$0xf]
        %v1777 = vld [vmem:[%s800 + $0x30] sm:$0xf]
        %v1778 = vld [vmem:[%s800 + $0x34] sm:$0xf]
        %v1779 = vld [vmem:[%s800 + $0x38] sm:$0xf]
        %v1780 = vld [vmem:[%s800 + $0x3c] sm:$0xf]
        %v1781 = vld [vmem:[%s803] sm:$0x1]
        %v1783 = vlaneseq
        %v1784 = vshrl.u32 %v1783, 7
        %v1785 = vsub.s32 0, %v1784
        %v1786 = vrot.slane %v1781, %v1785
        %v1804 = vunpack.c.l.b16 %v1765
        %v1805 = vunpack.c.l.b16 %v1766
        %v1806 = vunpack.c.l.b16 %v1767
        %v1807 = vunpack.c.l.b16 %v1768
        %v1808 = vunpack.c.l.b16 %v1769
        %v1809 = vunpack.c.l.b16 %v1770
        %v1810 = vunpack.c.l.b16 %v1771
        %v1811 = vunpack.c.l.b16 %v1772
        %v1812 = vunpack.c.l.b16 %v1773
        %v1813 = vunpack.c.l.b16 %v1774
        %v1814 = vunpack.c.l.b16 %v1775
        %v1815 = vunpack.c.l.b16 %v1776
        %v1816 = vunpack.c.l.b16 %v1777
        %v1817 = vunpack.c.l.b16 %v1778
        %v1818 = vunpack.c.l.b16 %v1779
        %v1819 = vunpack.c.l.b16 %v1780
        %v1820 = vpack.c.b16 %v1805, %v1804
        %v1821 = vpack.c.b16 %v1807, %v1806
        %v1822 = vpack.c.b16 %v1809, %v1808
        %v1823 = vpack.c.b16 %v1811, %v1810
        %v1824 = vpack.c.b16 %v1813, %v1812
        %v1825 = vpack.c.b16 %v1815, %v1814
        %v1826 = vpack.c.b16 %v1817, %v1816
        %v1827 = vpack.c.b16 %v1819, %v1818
        %1836 = vmatprep.subr.bf16.mxu0 0
        %1837 = vmatpush1.bf16.msra.mxu0 %v1820
        %1838 = vmatprep.subr.bf16.mxu0 0
        %1839 = vmatpush1.bf16.msra.mxu0 %v1821
        %1840 = vmatprep.subr.bf16.mxu0 0
        %1841 = vmatpush1.bf16.msra.mxu0 %v1822
        %1842 = vmatprep.subr.bf16.mxu0 0
        %1843 = vmatpush1.bf16.msra.mxu0 %v1823
        %1844 = vmatprep.subr.bf16.mxu0 0
        %1845 = vmatpush1.bf16.msra.mxu0 %v1824
        %1846 = vmatprep.subr.bf16.mxu0 0
        %1847 = vmatpush1.bf16.msra.mxu0 %v1825
        %1848 = vmatprep.subr.bf16.mxu0 0
        %1849 = vmatpush1.bf16.msra.mxu0 %v1826
        %1850 = vmatprep.subr.bf16.mxu0 0
        %1851 = vmatpush1.bf16.msra.mxu0 %v1827
        %1852 = vmatprep.subr.bf16.mxu0 0
        %1853 = vmatpush1.bf16.msra.mxu0 0
        %1854 = vmatprep.subr.bf16.mxu0 0
        %1855 = vmatpush1.bf16.msra.mxu0 0
        %1856 = vmatprep.subr.bf16.mxu0 0
        %1857 = vmatpush1.bf16.msra.mxu0 0
        %1858 = vmatprep.subr.bf16.mxu0 0
        %1859 = vmatpush1.bf16.msra.mxu0 0
        %1860 = vmatprep.subr.bf16.mxu0 0
        %1861 = vmatpush1.bf16.msra.mxu0 0
        %1862 = vmatprep.subr.bf16.mxu0 0
        %1863 = vmatpush1.bf16.msra.mxu0 0
        %1864 = vmatprep.subr.bf16.mxu0 0
        %1865 = vmatpush1.bf16.msra.mxu0 0
        %1866 = vmatprep.subr.bf16.mxu0 0
        %1867 = vmatpush1.bf16.msra.mxu0 0
        %1868 = vmatprep.mubr.bf16.mxu0 0
        %1869 = vmatmul.mubr.bf16.gmra.mrb[0].mxu0 %v1764
        %v1870 = vpop.f32.mrb[0].mxu0
        %v1871 = vadd.f32 %v1786, %v1870
        %v1872 = vpop.f32.mrb[0].mxu0
        %v1873 = vpop.f32.mrb[0].mxu0
        %v1874 = vadd.f32 %v1786, %v1873
        %v1875 = vpop.f32.mrb[0].mxu0
        %1876 = vdwg.mxu0
        %v1877 = vadd.f32 %v1632, %v1871
        %v1878 = vadd.f32 %v1633, %v1874
        %p1879 = scmp.lt.s32.totalorder %s38, 1
        // Predicated region
        $region101: #{tpu_custom_call.1} parent=95 // pred_check
          %p1880 = pneg %p1879
        $region102: #{tpu_custom_call.1} parent=95 // pred_check_branch
          %1882 = sbr.rel (%p1880) target = $region104
        $region103: #{tpu_custom_call.1} parent=95 // pred_region
          %1883 = vst.msk [vmem:[#allocation2] sm:$0xff] %vm912, %v1877
          %1884 = vst.msk [vmem:[#allocation2 + $0x8] sm:$0xff] %vm912, %v1878
        $region104: #{tpu_custom_call.1} parent=95 // pred_fallthru
          _
        %p1885 = scmp.eq.s32.totalorder %s38, 1
        // Predicated region
        $region105: #{tpu_custom_call.1} parent=95 // pred_check
          %p1886 = pneg %p1885
        $region106: #{tpu_custom_call.1} parent=95 // pred_check_branch
          %1888 = sbr.rel (%p1886) target = $region108
        $region107: #{tpu_custom_call.1} parent=95 // pred_region
          %v1889 = vld [vmem:[%s16] sm:$0x1]
          %v1890 = vld [vmem:[%s17] sm:$0x1]
          %v1891 = vsel %vm912, %v1877, 0.0
          %1892 = vadd.xlane.f32.xlu0 %v1891
          %v1893 = vpop.xlane.xlu0 %1892
          %v1894 = vsel %vm912, %v1878, 0.0
          %1895 = vadd.xlane.f32.xlu0 %v1894
          %v1896 = vpop.xlane.xlu0 %1895
          %v1897 = vmul.f32 %v1893, %v919
          %v1898 = vmul.f32 %v1896, %v919
          %v1899 = vsub.f32 %v1877, %v1897
          %v1900 = vsub.f32 %v1878, %v1898
          %v1901 = vmul.f32 %v1899, %v1899
          %v1902 = vmul.f32 %v1900, %v1900
          %v1903 = vsel %vm912, %v1901, 0.0
          %1904 = vadd.xlane.f32.xlu0 %v1903
          %v1905 = vpop.xlane.xlu0 %1904
          %v1906 = vsel %vm912, %v1902, 0.0
          %1907 = vadd.xlane.f32.xlu0 %v1906
          %v1908 = vpop.xlane.xlu0 %1907
          %v1909 = vmul.f32 %v1905, %v919
          %v1910 = vmul.f32 %v1908, %v919
          %v1911 = vadd.f32 %v1909, 1e-05
          %v1912 = vadd.f32 %v1910, 1e-05
          %v1913 = vrsqrt.pop %v1911
          %v1914 = vrsqrt.pop %v1912
          %v1915 = vmul.f32 %v1899, %v1913
          %v1916 = vmul.f32 %v1900, %v1914
          %v1918 = vlaneseq
          %v1919 = vshrl.u32 %v1918, 7
          %v1920 = vsub.s32 0, %v1919
          %v1921 = vrot.slane %v1889, %v1920
          %v1923 = vmul.f32 %v1915, %v1921
          %v1924 = vmul.f32 %v1916, %v1921
          %v1926 = vlaneseq
          %v1927 = vshrl.u32 %v1926, 7
          %v1928 = vsub.s32 0, %v1927
          %v1929 = vrot.slane %v1890, %v1928
          %v1931 = vadd.f32 %v1923, %v1929
          %v1932 = vadd.f32 %v1924, %v1929
          %v1933 = vld [vmem:[%s18] sm:$0x1]
          %v1935 = vlaneseq
          %v1936 = vshrl.u32 %v1935, 7
          %v1937 = vsub.s32 0, %v1936
          %v1938 = vrot.slane %v1933, %v1937
          %v1940 = vmul.f32 %v1931, %v1938
          %v1941 = vmul.f32 %v1932, %v1938
          %v1942 = vsel %vm912, %v1940, 0.0
          %1943 = vadd.xlane.f32.xlu0 %v1942
          %v1944 = vpop.xlane.xlu0 %1943
          %v1945 = vsel %vm912, %v1941, 0.0
          %1946 = vadd.xlane.f32.xlu0 %v1945
          %v1947 = vpop.xlane.xlu0 %1946
          %1948 = vxpose.xlu0.b32.start [1/16] %v1944, 128
          %1949 = vxpose.xlu0.b32.cont [2/16] %v1947, 128
          %1950 = vxpose.xlu0.b32.cont [3/16] 0.0, 128
          %1951 = vxpose.xlu0.b32.cont [4/16] 0.0, 128
          %1952 = vxpose.xlu0.b32.cont [5/16] 0.0, 128
          %1953 = vxpose.xlu0.b32.cont [6/16] 0.0, 128
          %1954 = vxpose.xlu0.b32.cont [7/16] 0.0, 128
          %1955 = vxpose.xlu0.b32.cont [8/16] 0.0, 128
          %1956 = vxpose.xlu0.b32.cont [9/16] 0.0, 128
          %1957 = vxpose.xlu0.b32.cont [10/16] 0.0, 128
          %1958 = vxpose.xlu0.b32.cont [11/16] 0.0, 128
          %1959 = vxpose.xlu0.b32.cont [12/16] 0.0, 128
          %1960 = vxpose.xlu0.b32.cont [13/16] 0.0, 128
          %1961 = vxpose.xlu0.b32.cont [14/16] 0.0, 128
          %1962 = vxpose.xlu0.b32.cont [15/16] 0.0, 128
          %1963 = vxpose.xlu0.b32.end [16/16] 0.0, 128
          %v1964 = vpop.trf.xlu0
          %v1965 = vpop.trf.xlu0
          %v1966 = vpop.trf.xlu0
          %v1967 = vpop.trf.xlu0
          %v1968 = vpop.trf.xlu0
          %v1969 = vpop.trf.xlu0
          %v1970 = vpop.trf.xlu0
          %v1971 = vpop.trf.xlu0
          %v1972 = vpop.trf.xlu0
          %v1973 = vpop.trf.xlu0
          %v1974 = vpop.trf.xlu0
          %v1975 = vpop.trf.xlu0
          %v1976 = vpop.trf.xlu0
          %v1977 = vpop.trf.xlu0
          %v1978 = vpop.trf.xlu0
          %v1979 = vpop.trf.xlu0
          %vm1980 = vcmask 122880
          %1981 = vst.msk [vmem:[%s754] sm:$0x1] %vm1980, %v1964
        $region108: #{tpu_custom_call.1} parent=95 // pred_fallthru
          _
        %s1982 = sand.u32 %s517, 1
        %s1983 = scalar_lea.sflag [#allocation4], %s1982
        %s1984 = sand.u32 %s517, 1
        %s1985 = scalar_lea.vmem [#allocation3], %s1984
        // Predicated region
        $region109: #{tpu_custom_call.1} parent=95 // pred_check
          %p1986 = pneg %p527
        $region110: #{tpu_custom_call.1} parent=95 // pred_check_branch
          %1988 = sbr.rel (%p1986) target = $region112
        $region111: #{tpu_custom_call.1} parent=95 // pred_region
          %s1990 = ssub.s32 16, 16
          %1991 = vsyncadd %s1983, %s1990
          %s1992 = smul.addr %s37, 16
          %s1993 = scalar_lea.hbm %s19, %s1992
          %s1995 = sshll.u32 %s1985, 4
          %s1996 = int_to_ptr.vmem [resolvable:$true] %s1995
          %1998 = dma.vmem_to_hbm [thread:$0]  %s1996, 16, %s1993, %s1983
        $region112: #{tpu_custom_call.1} parent=95 // pred_fallthru
          _
      $region96: #{tpu_custom_call.1} parent=5 // pred_fallthru
        _
      %p1999 = scmp.le.s32.totalorder 2, %s28
      // Predicated region
      $region113: #{tpu_custom_call.1} parent=5 // pred_check
        %p2000 = pneg %p1999
      $region114: #{tpu_custom_call.1} parent=5 // pred_check_branch
        %2002 = sbr.rel (%p2000) target = $region116
      $region115: #{tpu_custom_call.1} parent=5 // pred_region
        %s2003 = ssub.s32 %s28, 2
        // Predicated region
        $region117: #{tpu_custom_call.1} parent=115 // pred_check
          %p2004 = pneg %p533
        $region118: #{tpu_custom_call.1} parent=115 // pred_check_branch
          %2006 = sbr.rel (%p2004) target = $region120
        $region119: #{tpu_custom_call.1} parent=115 // pred_region
          %s2007 = sand.u32 %s518, 1
          %s2008 = scalar_lea.sflag [#allocation4], %s2007
          %s2009 = sand.u32 %s518, 1
          %s2010 = scalar_lea.vmem [#allocation3], %s2009
          %2011 = dma.done %s2008, 16
        $region120: #{tpu_custom_call.1} parent=115 // pred_fallthru
          _
      $region116: #{tpu_custom_call.1} parent=5 // pred_fallthru
        _
    $region6: #{tpu_custom_call.1} parent=1 // loop_footer
      %s32 = sadd.s32 1, %s28
    $region7: #{tpu_custom_call.1} parent=1 // loop_footer_branch
      %27 = sbr.rel target = $region3
    $region8: #{tpu_custom_call.1} parent=1 // loop_exit
      _
    %2012 = vsyncpa [#allocation4], 1
    %s2013 = scalar_lea.sflag [#allocation4], 1
    %2014 = vsyncpa %s2013, 1

</llo_original>
